<compile_context>
chip_gen: v6e
topology: v6e:2x2x1
jax: 0.10.0
libtpu: 0.0.40
codegen_flags: <defaults>
</compile_context>

<pallas_src>
import functools
import math

import jax
import jax.numpy as jnp
from jax.experimental import pallas as pl
from jax.experimental.pallas import tpu as pltpu

_LANES = 128
_MAX_M_TILE = 1024


def _round_up(x, m):
    return ((x + m - 1) // m) * m


def _cdiv(a, b):
    return -(-a // b)


def _pick_m_tile(mraw, min_tiles=1):
    """Tile the flattened-output row axis (multiple of 8 rows per tile)."""
    tiles = max(min_tiles, _cdiv(mraw, _MAX_M_TILE))
    tm = min(_MAX_M_TILE, _round_up(_cdiv(mraw, tiles), 8))
    num_m = _cdiv(mraw, tm)
    return tm, num_m * tm


# ----------------------------------------------------------------------------
# Fused Pallas kernel:
#   out[b, m, :] = act( concat_t(x[b, phase_t, m+off_t, :]) @ W_fold * scale + bias )
# One MXU dot per grid step (K = k*k*cin), grid = (batch, m_tiles, n_tiles).
# ----------------------------------------------------------------------------
def _fused_conv_matmul(xflat, w_folded, scale, bias, tap_phase, tap_off, *,
                       mfull, tm, tn, relu):
    n, nph, lf, cin = xflat.shape
    kdim, coutp = w_folded.shape
    ntaps = len(tap_off)
    num_m = mfull // tm
    num_n = coutp // tn

    # Group taps that can share a single (tm[+8], cin) VMEM load: same phase
    # and same 8-aligned base row offset.
    groups = {}
    for t, (ph, off) in enumerate(zip(tap_phase, tap_off)):
        base = (off // 8) * 8
        groups.setdefault((ph, base), []).append((t, off - base))

    def kernel(x_ref, w_ref, s_ref, b_ref, o_ref):
        if num_m > 1:
            m0 = pl.multiple_of(pl.program_id(1) * tm, 8)
        else:
            m0 = 0                                   # static path for small M
        parts = [None] * ntaps
        for (ph, base), items in groups.items():
            pad = 8 if max(r for _, r in items) > 0 else 0
            ld = x_ref[0, ph, pl.ds(m0 + base, tm + pad), :]   # one load/group
            for t, rem in items:
                parts[t] = ld[rem:rem + tm, :] if pad else ld
        # Fold all k*k taps into one MXU contraction (K = ntaps * cin).
        lhs = parts[0] if ntaps == 1 else jnp.concatenate(parts, axis=-1)
        acc = jnp.dot(lhs, w_ref[...], preferred_element_type=jnp.float32)
        acc = acc * s_ref[...] + b_ref[...]
        if relu:
            acc = jnp.maximum(acc, 0.0)
        o_ref[0, :, :] = acc.astype(o_ref.dtype)

    flops = 2 * n * mfull * kdim * coutp
    bytes_accessed = int(xflat.size * xflat.dtype.itemsize
                         + w_folded.size * 2
                         + (scale.size + bias.size) * 4
                         + n * mfull * coutp * 4)

    # Explicit VMEM budget: double-buffered blocks + in-kernel temporaries.
    x_blk = nph * lf * cin * xflat.dtype.itemsize
    w_blk = kdim * tn * 2
    sb_blk = 2 * tn * 4
    o_blk = tm * tn * 4
    tmp = (tm * kdim * 2 + tm * tn * 4
           + len(groups) * (tm + 8) * cin * 2)
    need = 2 * (x_blk + w_blk + sb_blk + o_blk) + tmp
    vmem_limit = int(min(96 * 2 ** 20,
                         max(32 * 2 ** 20, int(need * 1.5) + 8 * 2 ** 20)))

    return pl.pallas_call(
        kernel,
        out_shape=jax.ShapeDtypeStruct((n, mfull, coutp), jnp.float32),
        grid_spec=pltpu.PrefetchScalarGridSpec(
            num_scalar_prefetch=0,
            grid=(n, num_m, num_n),
            in_specs=[
                # TODO(synk): for very large images, window this block along
                # the lf axis (O(tm) rows) instead of the whole flat image.
                pl.BlockSpec((1, nph, lf, cin), lambda b, m, nb: (b, 0, 0, 0)),
                pl.BlockSpec((kdim, tn), lambda b, m, nb: (0, nb)),
                pl.BlockSpec((1, tn), lambda b, m, nb: (0, nb)),
                pl.BlockSpec((1, tn), lambda b, m, nb: (0, nb)),
            ],
            out_specs=pl.BlockSpec((1, tm, tn), lambda b, m, nb: (b, m, nb)),
        ),
        compiler_params=pltpu.CompilerParams(
            dimension_semantics=("parallel", "parallel", "parallel"),
            vmem_limit_bytes=vmem_limit,
        ),
        cost_estimate=pl.CostEstimate(
            flops=flops, transcendentals=0, bytes_accessed=bytes_accessed),
    )(xflat, w_folded, scale, bias)


# ----------------------------------------------------------------------------
# Conv core: stride-s cross-correlation of a pre-padded NHWC input, fused with
# per-channel scale/bias and optional ReLU.  w: (Cout, Cin, kh, kw).
# ----------------------------------------------------------------------------
def _conv_core(xp, w, scale, bias, *, stride, ho, wo, relu):
    n, _, _, cin = xp.shape
    cout, _, kh, kw = w.shape
    s = stride

    dmax_y = (kh - 1) // s
    dmax_x = (kw - 1) // s
    hph = ho + dmax_y
    # Row stride of the flattened phase padded to a multiple of 8 so taps of
    # the same kernel row share an 8-aligned base (VMEM load dedup).
    wph = _round_up(wo + dmax_x, 8)

    # Pad / crop the (already conv-padded) input to an exact phase grid.
    need_h, need_w = s * hph, s * wph
    xp = xp[:, :need_h, :need_w, :]
    xp = jnp.pad(xp, ((0, 0), (0, need_h - xp.shape[1]),
                      (0, need_w - xp.shape[2]), (0, 0)))

    # Split into the s*s stride phases, flatten each phase spatially and cast
    # to bf16 (MXU operand dtype) while XLA is already touching the data.
    nph = s * s
    xph = xp.reshape(n, hph, s, wph, s, cin)
    xph = jnp.transpose(xph, (0, 2, 4, 1, 3, 5)).reshape(n, nph, hph * wph, cin)
    xph = xph.astype(jnp.bfloat16)

    mraw = ho * wph                        # flattened output rows (+ margin cols)
    tm, mfull = _pick_m_tile(mraw, min_tiles=2 if n == 1 else 1)
    off_max = dmax_y * wph + dmax_x
    lf = mfull + off_max + 8               # +8 head-room for aligned-base loads
    xph = jnp.pad(xph, ((0, 0), (0, 0), (0, lf - hph * wph), (0, 0)))

    tap_phase, tap_off = [], []
    for ky in range(kh):
        for kx in range(kw):
            tap_phase.append((ky % s) * s + (kx % s))
            tap_off.append((ky // s) * wph + (kx // s))

    # Lane-dense Cout tiling (128- or 256-wide blocks).
    tn = _LANES if cout <= _LANES else 2 * _LANES
    coutp = _round_up(cout, tn)

    # Fold all taps along the contraction axis: (kh*kw*cin, coutp), bf16.
    w_folded = jnp.transpose(w, (2, 3, 1, 0)).reshape(kh * kw * cin, cout)
    w_folded = jnp.pad(w_folded, ((0, 0), (0, coutp - cout))).astype(jnp.bfloat16)
    scale_p = jnp.pad(scale.astype(jnp.float32), (0, coutp - cout)).reshape(1, coutp)
    bias_p = jnp.pad(bias.astype(jnp.float32), (0, coutp - cout)).reshape(1, coutp)

    out_flat = _fused_conv_matmul(xph, w_folded, scale_p, bias_p,
                                  tuple(tap_phase), tuple(tap_off),
                                  mfull=mfull, tm=tm, tn=tn, relu=relu)
    # Margin columns (wo..wph) are junk; this crop is required for correctness.
    out = out_flat[:, :ho * wph, :cout].reshape(n, ho, wph, cout)
    return out[:, :, :wo, :]


def conv2d_nhwc(x, w, scale, bias, *, stride, padding, relu):
    """PyTorch Conv2d semantics (cross-correlation), NHWC in/out."""
    n, h, wd, _ = x.shape
    _, _, kh, kw = w.shape
    ho = (h + 2 * padding - kh) // stride + 1
    wo = (wd + 2 * padding - kw) // stride + 1
    xp = jnp.pad(x, ((0, 0), (padding, padding), (padding, padding), (0, 0)))
    return _conv_core(xp, w, scale, bias, stride=stride, ho=ho, wo=wo, relu=relu)


def conv_transpose2d_nhwc(x, w_t, scale, bias, *, stride, padding, relu):
    """PyTorch ConvTranspose2d (weight (Cin, Cout, k, k)) via sub-pixel phase
    decomposition: stride*stride stride-1 convs on the *undilated* input,
    assembled with a single transpose/reshape (no strided HBM scatters)."""
    n, hi, wi, _ = x.shape
    _, cout, kh, kw = w_t.shape
    s, p = stride, padding
    ho = (hi - 1) * s + kh - 2 * p
    wo = (wi - 1) * s + kw - 2 * p
    pe_y = kh - 1 - p
    pe_x = kw - 1 - p

    def phase_out(ry, rx, qy, qx):
        a0 = (pe_y - ry) % s
        ta = len(range(a0, kh, s))
        off_y = (ry - pe_y + a0) // s
        b0 = (pe_x - rx) % s
        tb = len(range(b0, kw, s))
        off_x = (rx - pe_x + b0) // s

        if ta == 0 or tb == 0:               # no kernel tap hits this phase
            val = bias.astype(jnp.float32)
            if relu:
                val = jnp.maximum(val, 0.0)
            return jnp.broadcast_to(val, (n, qy, qx, cout))

        # Sub-kernel in cross-correlation layout (already flipped).
        ay = kh - 1 - (a0 + s * jnp.arange(ta))
        bx = kw - 1 - (b0 + s * jnp.arange(tb))
        w_sub = w_t[:, :, ay[:, None], bx[None, :]]          # (cin,cout,ta,tb)
        w_sub = jnp.transpose(w_sub, (1, 0, 2, 3))           # (cout,cin,ta,tb)

        # Phase input window  xin[r, c] = x[r + off_y, c + off_x]
        ly, lx = qy + ta - 1, qx + tb - 1
        pad_t = max(0, -off_y)
        pad_l = max(0, -off_x)
        pad_b = max(0, off_y + ly - hi)
        pad_r = max(0, off_x + lx - wi)
        xe = jnp.pad(x, ((0, 0), (pad_t, pad_b), (pad_l, pad_r), (0, 0)))
        ys, xs = off_y + pad_t, off_x + pad_l
        xin = xe[:, ys:ys + ly, xs:xs + lx, :]
        return _conv_core(xin, w_sub, scale, bias,
                          stride=1, ho=qy, wo=qx, relu=relu)

    if ho % s == 0 and wo % s == 0:
        # Fast path: all phases equal-sized -> one stack + transpose + reshape
        # instead of s*s full-output strided scatters.
        qy, qx = ho // s, wo // s
        phases = [phase_out(ry, rx, qy, qx)
                  for ry in range(s) for rx in range(s)]
        stacked = jnp.stack(phases).reshape(s, s, n, qy, qx, cout)
        return jnp.transpose(stacked, (2, 3, 0, 4, 1, 5)).reshape(n, ho, wo, cout)

    # Fallback: ragged phases (ho or wo not divisible by stride).
    out = jnp.zeros((n, ho, wo, cout), jnp.float32)
    for ry in range(s):
        qy = _cdiv(ho - ry, s)
        for rx in range(s):
            qx = _cdiv(wo - rx, s)
            out = out.at[:, ry::s, rx::s, :].set(phase_out(ry, rx, qy, qx))
    return out


# ----------------------------------------------------------------------------
# BasicConv: params + forward (matches the PyTorch module semantics)
# ----------------------------------------------------------------------------
def init_basic_conv(key, in_ch, out_ch, kernel_size, *, bias=True, norm=False,
                    transpose=False):
    if bias and norm:
        bias = False
    k = kernel_size
    kw_key, kb_key = jax.random.split(key)
    if transpose:
        w_shape = (in_ch, out_ch, k, k)
        fan_in = out_ch * k * k
    else:
        w_shape = (out_ch, in_ch, k, k)
        fan_in = in_ch * k * k
    bound = 1.0 / math.sqrt(fan_in)
    params = {"w": jax.random.uniform(kw_key, w_shape, jnp.float32, -bound, bound)}
    if bias:
        params["b"] = jax.random.uniform(kb_key, (out_ch,), jnp.float32,
                                         -bound, bound)
    if norm:  # BatchNorm2d defaults (eval-mode running stats)
        params["gamma"] = jnp.ones((out_ch,), jnp.float32)
        params["beta"] = jnp.zeros((out_ch,), jnp.float32)
        params["mean"] = jnp.zeros((out_ch,), jnp.float32)
        params["var"] = jnp.ones((out_ch,), jnp.float32)
    return params


def basic_conv_forward(params, x_nchw, *, kernel_size, stride, relu=True,
                       norm=False, transpose=False):
    k = kernel_size
    x = jnp.transpose(x_nchw, (0, 2, 3, 1))          # NCHW -> NHWC
    w = params["w"]
    cout = w.shape[1] if transpose else w.shape[0]
    conv_b = params.get("b", jnp.zeros((cout,), jnp.float32))

    if norm:
        # eval-mode BatchNorm folded into per-channel scale/shift.
        eps = 1e-5
        scale = params["gamma"] / jnp.sqrt(params["var"] + eps)
        eff_scale = scale
        eff_bias = conv_b * scale + (params["beta"] - params["mean"] * scale)
    else:
        eff_scale = jnp.ones((cout,), jnp.float32)
        eff_bias = conv_b

    if transpose:
        padding = k // 2 - 1
        y = conv_transpose2d_nhwc(x, w, eff_scale, eff_bias,
                                  stride=stride, padding=padding, relu=relu)
    else:
        padding = k // 2
        y = conv2d_nhwc(x, w, eff_scale, eff_bias,
                        stride=stride, padding=padding, relu=relu)
    return jnp.transpose(y, (0, 3, 1, 2))             # NHWC -> NCHW


# ----------------------------------------------------------------------------
# Pure-XLA reference (for in-script correctness check)
# ----------------------------------------------------------------------------
def _reference_forward(params, x, *, kernel_size, stride, relu, norm, transpose):
    k = kernel_size
    w = params["w"]
    if transpose:
        p = k // 2 - 1
        w_conv = jnp.transpose(w[:, :, ::-1, ::-1], (1, 0, 2, 3))
        y = jax.lax.conv_general_dilated(
            x, w_conv, window_strides=(1, 1),
            padding=[(k - 1 - p, k - 1 - p)] * 2,
            lhs_dilation=(stride, stride),
            dimension_numbers=("NCHW", "OIHW", "NCHW"),
            precision=jax.lax.Precision.HIGHEST)
        cout = w.shape[1]
    else:
        p = k // 2
        y = jax.lax.conv_general_dilated(
            x, w, window_strides=(stride, stride),
            padding=[(p, p)] * 2,
            dimension_numbers=("NCHW", "OIHW", "NCHW"),
            precision=jax.lax.Precision.HIGHEST)
        cout = w.shape[0]
    y = y + params.get("b", jnp.zeros((cout,))).reshape(1, cout, 1, 1)
    if norm:
        eps = 1e-5
        scale = params["gamma"] / jnp.sqrt(params["var"] + eps)
        shift = params["beta"] - params["mean"] * scale
        y = y * scale.reshape(1, cout, 1, 1) + shift.reshape(1, cout, 1, 1)
    return jnp.maximum(y, 0.0) if relu else y


# ----------------------------------------------------------------------------
if __name__ == "__main__":
    root = jax.random.PRNGKey(0)
    kx, k1, k2, k3, k4 = jax.random.split(root, 5)

    x = jax.random.normal(kx, (2, 4, 16, 16), dtype=jnp.float32)

    layer_cfgs = [
        dict(in_ch=4, out_ch=32, kernel_size=3, stride=1,
             relu=True, norm=False, transpose=False),
        dict(in_ch=32, out_ch=64, kernel_size=3, stride=2,
             relu=True, norm=False, transpose=False),
        dict(in_ch=64, out_ch=64, kernel_size=3, stride=1,
             relu=False, norm=True, transpose=False),
        dict(in_ch=64, out_ch=32, kernel_size=4, stride=2,
             relu=True, norm=False, transpose=True),
    ]
    keys = [k1, k2, k3, k4]

    cur = x
    for lkey, cfg in zip(keys, layer_cfgs):
        params = init_basic_conv(lkey, cfg["in_ch"], cfg["out_ch"],
                                 cfg["kernel_size"], bias=True,
                                 norm=cfg["norm"], transpose=cfg["transpose"])
        fwd = jax.jit(functools.partial(
            basic_conv_forward, kernel_size=cfg["kernel_size"],
            stride=cfg["stride"], relu=cfg["relu"], norm=cfg["norm"],
            transpose=cfg["transpose"]))
        out = fwd(params, cur)
        jax.block_until_ready(out)

        ref = _reference_forward(params, cur, kernel_size=cfg["kernel_size"],
                                 stride=cfg["stride"], relu=cfg["relu"],
                                 norm=cfg["norm"], transpose=cfg["transpose"])
        assert out.shape == ref.shape, (out.shape, ref.shape)
        # bf16 MXU operands (f32 accumulation) -> ~1e-2 relative error vs the
        # f32 HIGHEST-precision reference; tolerance reflects that.
        err = float(jnp.max(jnp.abs(out - ref)))
        tol = 5e-2 * max(1.0, float(jnp.max(jnp.abs(ref))))
        assert err <= tol, (cfg, err, tol)
        cur = out

    assert cur.shape == (2, 32, 16, 16), cur.shape
    assert cur.dtype == jnp.float32
    print("KERNEL_OK")
</pallas_src>

<mosaic_0001>
module attributes {stable_mosaic.version = 11 : i64} {
  func.func @kernel(%arg0: i32, %arg1: i32, %arg2: i32, %arg3: memref<1x1x442x4xbf16, #tpu.memory_space<vmem>>, %arg4: memref<36x128xbf16, #tpu.memory_space<vmem>>, %arg5: memref<1x128xf32, #tpu.memory_space<vmem>>, %arg6: memref<1x128xf32, #tpu.memory_space<vmem>>, %arg7: memref<1x384x128xf32, #tpu.memory_space<vmem>>) attributes {dimension_semantics = [#tpu.dimension_semantics<parallel>, #tpu.dimension_semantics<parallel>, #tpu.dimension_semantics<parallel>], iteration_bounds = array<i64: 2, 1, 1>, scalar_prefetch = 0 : i64, scratch_operands = 0 : i64, tpu.core_type = #tpu.core_type<tc>, window_params = [{transform_indices = @transform_0, window_bounds = array<i64: 1, 1, 442, 4>}, {transform_indices = @transform_1, window_bounds = array<i64: 36, 128>}, {transform_indices = @transform_2, window_bounds = array<i64: 1, 128>}, {transform_indices = @transform_3, window_bounds = array<i64: 1, 128>}, {transform_indices = @transform_4, window_bounds = array<i64: 1, 384, 128>}]} {
    %c0 = arith.constant 0 : index
    %c0_0 = arith.constant 0 : index
    %c0_1 = arith.constant 0 : index
    %c0_2 = arith.constant 0 : index
    %0 = vector.load %arg3[%c0, %c0_0, %c0_1, %c0_2] : memref<1x1x442x4xbf16, #tpu.memory_space<vmem>>, vector<1x1x392x4xbf16>
    %1 = vector.shape_cast %0 : vector<1x1x392x4xbf16> to vector<392x4xbf16>
    %2 = vector.extract_strided_slice %1 {offsets = [0, 0], sizes = [384, 4], strides = [1, 1]} : vector<392x4xbf16> to vector<384x4xbf16>
    %3 = vector.extract_strided_slice %1 {offsets = [1, 0], sizes = [384, 4], strides = [1, 1]} : vector<392x4xbf16> to vector<384x4xbf16>
    %4 = vector.extract_strided_slice %1 {offsets = [2, 0], sizes = [384, 4], strides = [1, 1]} : vector<392x4xbf16> to vector<384x4xbf16>
    %c0_3 = arith.constant 0 : index
    %c0_4 = arith.constant 0 : index
    %c24 = arith.constant 24 : index
    %c0_5 = arith.constant 0 : index
    %5 = vector.load %arg3[%c0_3, %c0_4, %c24, %c0_5] : memref<1x1x442x4xbf16, #tpu.memory_space<vmem>>, vector<1x1x392x4xbf16>
    %6 = vector.shape_cast %5 : vector<1x1x392x4xbf16> to vector<392x4xbf16>
    %7 = vector.extract_strided_slice %6 {offsets = [0, 0], sizes = [384, 4], strides = [1, 1]} : vector<392x4xbf16> to vector<384x4xbf16>
    %8 = vector.extract_strided_slice %6 {offsets = [1, 0], sizes = [384, 4], strides = [1, 1]} : vector<392x4xbf16> to vector<384x4xbf16>
    %9 = vector.extract_strided_slice %6 {offsets = [2, 0], sizes = [384, 4], strides = [1, 1]} : vector<392x4xbf16> to vector<384x4xbf16>
    %c0_6 = arith.constant 0 : index
    %c0_7 = arith.constant 0 : index
    %c48 = arith.constant 48 : index
    %c0_8 = arith.constant 0 : index
    %10 = vector.load %arg3[%c0_6, %c0_7, %c48, %c0_8] : memref<1x1x442x4xbf16, #tpu.memory_space<vmem>>, vector<1x1x392x4xbf16>
    %11 = vector.shape_cast %10 : vector<1x1x392x4xbf16> to vector<392x4xbf16>
    %12 = vector.extract_strided_slice %11 {offsets = [0, 0], sizes = [384, 4], strides = [1, 1]} : vector<392x4xbf16> to vector<384x4xbf16>
    %13 = vector.extract_strided_slice %11 {offsets = [1, 0], sizes = [384, 4], strides = [1, 1]} : vector<392x4xbf16> to vector<384x4xbf16>
    %14 = vector.extract_strided_slice %11 {offsets = [2, 0], sizes = [384, 4], strides = [1, 1]} : vector<392x4xbf16> to vector<384x4xbf16>
    %15 = tpu.concatenate %2, %3, %4, %7, %8, %9, %12, %13, %14 in 1 : vector<384x4xbf16>, vector<384x4xbf16>, vector<384x4xbf16>, vector<384x4xbf16>, vector<384x4xbf16>, vector<384x4xbf16>, vector<384x4xbf16>, vector<384x4xbf16>, vector<384x4xbf16> -> vector<384x36xbf16>
    %c0_9 = arith.constant 0 : index
    %c0_10 = arith.constant 0 : index
    %16 = vector.load %arg4[%c0_9, %c0_10] : memref<36x128xbf16, #tpu.memory_space<vmem>>, vector<36x128xbf16>
    %cst = arith.constant dense<0.000000e+00> : vector<384x128xf32>
    %17 = tpu.matmul %15, %16, %cst {dimension_numbers = #tpu.dot_dimension_numbers<[1], [0], [0], [1], [0, 0, 1, 1], [], []>} : vector<384x36xbf16>, vector<36x128xbf16>, vector<384x128xf32> -> vector<384x128xf32>
    %c0_11 = arith.constant 0 : index
    %c0_12 = arith.constant 0 : index
    %18 = vector.load %arg5[%c0_11, %c0_12] : memref<1x128xf32, #tpu.memory_space<vmem>>, vector<1x128xf32>
    %19 = vector.broadcast %18 : vector<1x128xf32> to vector<384x128xf32>
    %20 = arith.mulf %17, %19 : vector<384x128xf32>
    %c0_13 = arith.constant 0 : index
    %c0_14 = arith.constant 0 : index
    %21 = vector.load %arg6[%c0_13, %c0_14] : memref<1x128xf32, #tpu.memory_space<vmem>>, vector<1x128xf32>
    %22 = vector.broadcast %21 : vector<1x128xf32> to vector<384x128xf32>
    %23 = arith.addf %20, %22 : vector<384x128xf32>
    %cst_15 = arith.constant 0.000000e+00 : f32
    %24 = vector.broadcast %cst_15 : f32 to vector<384x128xf32>
    %25 = arith.maximumf %23, %24 : vector<384x128xf32>
    %c0_16 = arith.constant 0 : index
    %c0_17 = arith.constant 0 : index
    %c0_18 = arith.constant 0 : index
    %26 = vector.load %arg7[%c0_16, %c0_17, %c0_18] : memref<1x384x128xf32, #tpu.memory_space<vmem>>, vector<1x384x128xf32>
    %27 = vector.shape_cast %26 : vector<1x384x128xf32> to vector<384x128xf32>
    %28 = vector.shape_cast %25 : vector<384x128xf32> to vector<1x384x128xf32>
    tpu.vector_store %arg7[%c0_16, %c0_17, %c0_18], %28 {strides = array<i32>} : memref<1x384x128xf32, #tpu.memory_space<vmem>>, vector<1x384x128xf32>,
    return
  }
  func.func @transform_0(%arg0: i32, %arg1: i32, %arg2: i32) -> (i32, i32, i32, i32) {
    %c0_i32 = arith.constant 0 : i32
    %c0_i32_0 = arith.constant 0 : i32
    %c0_i32_1 = arith.constant 0 : i32
    %c0_i32_2 = arith.constant 0 : i32
    return %arg0, %c0_i32, %c0_i32_0, %c0_i32_1 : i32, i32, i32, i32
  }
  func.func @transform_1(%arg0: i32, %arg1: i32, %arg2: i32) -> (i32, i32) {
    %c0_i32 = arith.constant 0 : i32
    %c0_i32_0 = arith.constant 0 : i32
    return %c0_i32, %arg2 : i32, i32
  }
  func.func @transform_2(%arg0: i32, %arg1: i32, %arg2: i32) -> (i32, i32) {
    %c0_i32 = arith.constant 0 : i32
    %c0_i32_0 = arith.constant 0 : i32
    return %c0_i32, %arg2 : i32, i32
  }
  func.func @transform_3(%arg0: i32, %arg1: i32, %arg2: i32) -> (i32, i32) {
    %c0_i32 = arith.constant 0 : i32
    %c0_i32_0 = arith.constant 0 : i32
    return %c0_i32, %arg2 : i32, i32
  }
  func.func @transform_4(%arg0: i32, %arg1: i32, %arg2: i32) -> (i32, i32, i32) {
    %c0_i32 = arith.constant 0 : i32
    return %arg0, %arg1, %arg2 : i32, i32, i32
  }
}

</mosaic_0001>

<llo_original>
// kernel: basic_conv_forward.1
$region0: #{basic_conv_forward.1}
  #allocation0 [shape = 'u32[]', space=smem, size = 0x4, offset = 0x4, fixed_abs, tag = 'smem constant byte address 0x4 - core index']
  #allocation1 [shape = 'u32[144,128]{1,0:T(1,128)}', space=vmem, size = 0x12000, scoped, tag = 'internal scratch']
  %s0 = inlined_call_operand.vmem [shape: bf16[2,1,442,4], index: 0, kind: input, shape index: {}]
  %s1 = inlined_call_operand.vmem [shape: bf16[36,128], index: 1, kind: input, shape index: {}]
  %s2 = inlined_call_operand.vmem [shape: f32[1,128], index: 2, kind: input, shape index: {}]
  %s3 = inlined_call_operand.vmem [shape: f32[1,128], index: 3, kind: input, shape index: {}]
  %s4 = inlined_call_operand.vmem [shape: f32[2,384,128], index: 4, kind: output, shape index: {}]
  %s5 = sld [smem:[#allocation0]]
  $region49: #{basic_conv_forward.1} parent=0
    _
  %s7 = ssub.s32 1, %s5
  %s8 = scalar_select 0, %s7, %s5
  loop: start=0, step=1, limit=4
  $region2: #{basic_conv_forward.1} parent=0 // loop_pre_header
    _
  $region3: #{basic_conv_forward.1} parent=0 // loop_header
    %s10 = sphi 0, %s14
    %p11 = scmp.ge.s32.totalorder %s10, 4
    %s17 = sphi 0, %s36
    %s18 = sphi 0, %s32
    %s19 = sphi 0, %s28
    %s20 = sphi 0, %s17
    %s21 = sphi 0, %s18
    %s22 = sphi 0, %s19
    %s23 = sphi 0, %s20
    %s24 = sphi 0, %s21
    %s25 = sphi 0, %s22
    %s39 = sphi 0, %s41
    %s42 = sphi 0, %s39
    %s43 = sphi 0, %s42
    %s59 = sphi 0, %s43
    %s65 = sphi 0, %s67
    %s68 = sphi 0, %s65
    %s69 = sphi 0, %s68
    %s85 = sphi 0, %s69
    %s91 = sphi 0, %s93
    %s94 = sphi 0, %s91
    %s95 = sphi 0, %s94
    %s111 = sphi 0, %s95
    %s117 = sphi 0, %s119
    %s120 = sphi 0, %s117
    %s121 = sphi 0, %s120
    %s137 = sphi 0, %s121
    %s147 = sphi 0, %s149
    %s150 = sphi 0, %s147
    %s151 = sphi 0, %s150
    %s167 = sphi 0, %s151
  $region4: #{basic_conv_forward.1} parent=0 // loop_header_branch
    %13 = sbr.rel (%p11) target = $region8
  $region5: #{basic_conv_forward.1} parent=0 // loop_body
    %s15 = ssub.s32 %s10, 1
    %s16 = ssub.s32 %s10, 2
    %s26 = sadd.s32 1, %s19
    %p27 = scmp.ge.s32.totalorder %s26, 1
    %s28 = scalar_select %p27, 0, %s26
    %s29 = sadd.s32 1, %s18
    %s30 = scalar_select %p27, %s29, %s18
    %p31 = scmp.ge.s32.totalorder %s30, 1
    %s32 = scalar_select %p31, 0, %s30
    %s33 = sadd.s32 1, %s17
    %s34 = scalar_select %p31, %s33, %s17
    %p35 = scmp.ge.s32.totalorder %s34, 2
    %s36 = scalar_select %p35, 0, %s34
    %s37 = ssub.s32 %s17, %s36
    %p38 = scmp.eq.s32.totalorder %s37, 0
    %s40 = sadd.s32 %s39, 1
    %s41 = scalar_select %p38, %s39, %s40
    %p44 = pneg %p38
    %p45 = scmp.eq.s32.totalorder %s10, 1
    %p46 = por %p44, %p45
    %p47 = scmp.ne.s32.totalorder %s39, %s42
    %p48 = scmp.eq.s32.totalorder %s10, 0
    %p49 = por %p47, %p48
    %p50 = scmp.ne.s32.totalorder %s39, %s42
    %p51 = scmp.eq.s32.totalorder %s15, 1
    %p52 = por %p50, %p51
    %p53 = scmp.ne.s32.totalorder %s42, %s43
    %p54 = scmp.eq.s32.totalorder %s15, 0
    %p55 = por %p53, %p54
    %p56 = scmp.ne.s32.totalorder %s42, %s43
    %p57 = scmp.eq.s32.totalorder %s16, 1
    %p58 = por %p56, %p57
    %p60 = scmp.ne.s32.totalorder %s43, %s59
    %p61 = scmp.eq.s32.totalorder %s16, 0
    %p62 = por %p60, %p61
    %s63 = ssub.s32 %s19, %s28
    %p64 = scmp.eq.s32.totalorder %s63, 0
    %s66 = sadd.s32 %s65, 1
    %s67 = scalar_select %p64, %s65, %s66
    %p70 = pneg %p64
    %p71 = scmp.eq.s32.totalorder %s10, 1
    %p72 = por %p70, %p71
    %p73 = scmp.ne.s32.totalorder %s65, %s68
    %p74 = scmp.eq.s32.totalorder %s10, 0
    %p75 = por %p73, %p74
    %p76 = scmp.ne.s32.totalorder %s65, %s68
    %p77 = scmp.eq.s32.totalorder %s15, 1
    %p78 = por %p76, %p77
    %p79 = scmp.ne.s32.totalorder %s68, %s69
    %p80 = scmp.eq.s32.totalorder %s15, 0
    %p81 = por %p79, %p80
    %p82 = scmp.ne.s32.totalorder %s68, %s69
    %p83 = scmp.eq.s32.totalorder %s16, 1
    %p84 = por %p82, %p83
    %p86 = scmp.ne.s32.totalorder %s69, %s85
    %p87 = scmp.eq.s32.totalorder %s16, 0
    %p88 = por %p86, %p87
    %s89 = ssub.s32 %s19, %s28
    %p90 = scmp.eq.s32.totalorder %s89, 0
    %s92 = sadd.s32 %s91, 1
    %s93 = scalar_select %p90, %s91, %s92
    %p96 = pneg %p90
    %p97 = scmp.eq.s32.totalorder %s10, 1
    %p98 = por %p96, %p97
    %p99 = scmp.ne.s32.totalorder %s91, %s94
    %p100 = scmp.eq.s32.totalorder %s10, 0
    %p101 = por %p99, %p100
    %p102 = scmp.ne.s32.totalorder %s91, %s94
    %p103 = scmp.eq.s32.totalorder %s15, 1
    %p104 = por %p102, %p103
    %p105 = scmp.ne.s32.totalorder %s94, %s95
    %p106 = scmp.eq.s32.totalorder %s15, 0
    %p107 = por %p105, %p106
    %p108 = scmp.ne.s32.totalorder %s94, %s95
    %p109 = scmp.eq.s32.totalorder %s16, 1
    %p110 = por %p108, %p109
    %p112 = scmp.ne.s32.totalorder %s95, %s111
    %p113 = scmp.eq.s32.totalorder %s16, 0
    %p114 = por %p112, %p113
    %s115 = ssub.s32 %s19, %s28
    %p116 = scmp.eq.s32.totalorder %s115, 0
    %s118 = sadd.s32 %s117, 1
    %s119 = scalar_select %p116, %s117, %s118
    %p122 = pneg %p116
    %p123 = scmp.eq.s32.totalorder %s10, 1
    %p124 = por %p122, %p123
    %p125 = scmp.ne.s32.totalorder %s117, %s120
    %p126 = scmp.eq.s32.totalorder %s10, 0
    %p127 = por %p125, %p126
    %p128 = scmp.ne.s32.totalorder %s117, %s120
    %p129 = scmp.eq.s32.totalorder %s15, 1
    %p130 = por %p128, %p129
    %p131 = scmp.ne.s32.totalorder %s120, %s121
    %p132 = scmp.eq.s32.totalorder %s15, 0
    %p133 = por %p131, %p132
    %p134 = scmp.ne.s32.totalorder %s120, %s121
    %p135 = scmp.eq.s32.totalorder %s16, 1
    %p136 = por %p134, %p135
    %p138 = scmp.ne.s32.totalorder %s121, %s137
    %p139 = scmp.eq.s32.totalorder %s16, 0
    %p140 = por %p138, %p139
    %s141 = ssub.s32 %s17, %s36
    %s142 = ssub.s32 %s18, %s32
    %s143 = sor.u32 %s141, %s142
    %s144 = ssub.s32 %s19, %s28
    %s145 = sor.u32 %s143, %s144
    %p146 = scmp.eq.s32.totalorder %s145, 0
    %s148 = sadd.s32 %s147, 1
    %s149 = scalar_select %p146, %s147, %s148
    %p152 = pneg %p146
    %p153 = scmp.eq.s32.totalorder %s10, 1
    %p154 = por %p152, %p153
    %p155 = scmp.ne.s32.totalorder %s147, %s150
    %p156 = scmp.eq.s32.totalorder %s10, 0
    %p157 = por %p155, %p156
    %p158 = scmp.ne.s32.totalorder %s147, %s150
    %p159 = scmp.eq.s32.totalorder %s15, 1
    %p160 = por %p158, %p159
    %p161 = scmp.ne.s32.totalorder %s150, %s151
    %p162 = scmp.eq.s32.totalorder %s15, 0
    %p163 = por %p161, %p162
    %p164 = scmp.ne.s32.totalorder %s150, %s151
    %p165 = scmp.eq.s32.totalorder %s16, 1
    %p166 = por %p164, %p165
    %p168 = scmp.ne.s32.totalorder %s151, %s167
    %p169 = scmp.eq.s32.totalorder %s16, 0
    %p170 = por %p168, %p169
    %p171 = scmp.le.s32.totalorder 1, %s10
    %p172 = scmp.lt.s32.totalorder %s10, 3
    %p173 = pnand %p171, %p172
    %p174 = pneg %p173
    // Predicated region
    $region9: #{basic_conv_forward.1} parent=5 // pred_check
      _
    $region10: #{basic_conv_forward.1} parent=5 // pred_check_branch
      %176 = sbr.rel (%p173) target = $region12
    $region11: #{basic_conv_forward.1} parent=5 // pred_region
      %s177 = ssub.s32 %s10, 1
      // Predicated region
      $region13: #{basic_conv_forward.1} parent=11 // pred_check
        %p178 = pneg %p81
      $region14: #{basic_conv_forward.1} parent=11 // pred_check_branch
        %180 = sbr.rel (%p178) target = $region16
      $region15: #{basic_conv_forward.1} parent=11 // pred_region
        %p181 = scmp.lt.s32.totalorder %s22, 0
        %s182 = scalar_select %p181, %s22, 0
        %s183 = smul.addr %s182, 4
        %s184 = scalar_lea.vmem %s1, %s183
      $region16: #{basic_conv_forward.1} parent=11 // pred_fallthru
        _
      // Predicated region
      $region17: #{basic_conv_forward.1} parent=11 // pred_check
        %p185 = pneg %p107
      $region18: #{basic_conv_forward.1} parent=11 // pred_check_branch
        %187 = sbr.rel (%p185) target = $region20
      $region19: #{basic_conv_forward.1} parent=11 // pred_region
        %p188 = scmp.lt.s32.totalorder %s22, 0
        %s189 = scalar_select %p188, %s22, 0
        %s190 = scalar_lea.vmem %s2, %s189
      $region20: #{basic_conv_forward.1} parent=11 // pred_fallthru
        _
      // Predicated region
      $region21: #{basic_conv_forward.1} parent=11 // pred_check
        %p191 = pneg %p133
      $region22: #{basic_conv_forward.1} parent=11 // pred_check_branch
        %193 = sbr.rel (%p191) target = $region24
      $region23: #{basic_conv_forward.1} parent=11 // pred_region
        %p194 = scmp.lt.s32.totalorder %s22, 0
        %s195 = scalar_select %p194, %s22, 0
        %s196 = scalar_lea.vmem %s3, %s195
      $region24: #{basic_conv_forward.1} parent=11 // pred_fallthru
        _
    $region12: #{basic_conv_forward.1} parent=5 // pred_fallthru
      _
    %p197 = scmp.lt.s32.totalorder %s10, 2
    // Predicated region
    $region25: #{basic_conv_forward.1} parent=5 // pred_check
      %p198 = pneg %p197
    $region26: #{basic_conv_forward.1} parent=5 // pred_check_branch
      %200 = sbr.rel (%p198) target = $region28
    $region27: #{basic_conv_forward.1} parent=5 // pred_region
      // Predicated region
      $region29: #{basic_conv_forward.1} parent=27 // pred_check
        %p201 = pneg %p49
      $region30: #{basic_conv_forward.1} parent=27 // pred_check_branch
        %203 = sbr.rel (%p201) target = $region32
      $region31: #{basic_conv_forward.1} parent=27 // pred_region
        %p204 = scmp.lt.s32.totalorder %s17, 1
        %s205 = scalar_select %p204, %s17, 1
        %s206 = smul.addr %s205, 56
        %s207 = smul.addr %s206, 4
        %s208 = scalar_lea.vmem %s0, %s207
      $region32: #{basic_conv_forward.1} parent=27 // pred_fallthru
        _
    $region28: #{basic_conv_forward.1} parent=5 // pred_fallthru
      _
    %p209 = scmp.le.s32.totalorder 1, %s10
    %p210 = scmp.lt.s32.totalorder %s10, 3
    %p211 = pnand %p209, %p210
    %p212 = pneg %p211
    // Predicated region
    $region33: #{basic_conv_forward.1} parent=5 // pred_check
      _
    $region34: #{basic_conv_forward.1} parent=5 // pred_check_branch
      %214 = sbr.rel (%p211) target = $region36
    $region35: #{basic_conv_forward.1} parent=5 // pred_region
      %s215 = ssub.s32 %s10, 1
      %p216 = scmp.lt.s32.totalorder %s20, 1
      %s217 = scalar_select %p216, %s20, 1
      %s218 = smul.addr %s217, 56
      %s219 = smul.addr %s218, 4
      %s220 = scalar_lea.vmem %s0, %s219
      %p221 = pneg %p55
      %p222 = pneg %p52
      %p223 = scmp.lt.s32.totalorder %s22, 0
      %s224 = scalar_select %p223, %s22, 0
      %s225 = smul.addr %s224, 4
      %s226 = scalar_lea.vmem %s1, %s225
      %p227 = pneg %p81
      %p228 = pneg %p78
      %p229 = scmp.lt.s32.totalorder %s22, 0
      %s230 = scalar_select %p229, %s22, 0
      %s231 = scalar_lea.vmem %s2, %s230
      %p232 = pneg %p107
      %p233 = pneg %p104
      %p234 = scmp.lt.s32.totalorder %s22, 0
      %s235 = scalar_select %p234, %s22, 0
      %s236 = scalar_lea.vmem %s3, %s235
      %p237 = pneg %p133
      %p238 = pneg %p130
      %p239 = pneg %p163
      %p240 = pneg %p160
      %s241 = smul.u32 48, %s21
      %p242 = scmp.lt.s32.totalorder %s20, 1
      %s243 = scalar_select %p242, %s20, 1
      %p244 = scmp.lt.s32.totalorder %s241, 47
      %s245 = scalar_select %p244, %s241, 47
      %p246 = scmp.lt.s32.totalorder %s22, 0
      %s247 = scalar_select %p246, %s22, 0
      %s248 = sadd.s32 %s247, %s245
      %s249 = smul.addr %s243, 48
      %s250 = sadd.s32 %s248, %s249
      %s251 = smul.addr %s250, 8
      %s252 = scalar_lea.vmem %s4, %s251
      %p253 = scmp.lt.s32.totalorder %s20, 1
      %s254 = scalar_select %p253, %s20, 1
      %s255 = smul.addr %s254, 56
      %s256 = smul.addr %s255, 4
      %s257 = scalar_lea.vmem %s0, %s256
      %p258 = scmp.lt.s32.totalorder %s22, 0
      %s259 = scalar_select %p258, %s22, 0
      %s260 = smul.addr %s259, 4
      %s261 = scalar_lea.vmem %s1, %s260
      %p262 = scmp.lt.s32.totalorder %s22, 0
      %s263 = scalar_select %p262, %s22, 0
      %s264 = scalar_lea.vmem %s2, %s263
      %p265 = scmp.lt.s32.totalorder %s22, 0
      %s266 = scalar_select %p265, %s22, 0
      %s267 = scalar_lea.vmem %s3, %s266
      %s268 = smul.u32 48, %s21
      %p269 = scmp.lt.s32.totalorder %s20, 1
      %s270 = scalar_select %p269, %s20, 1
      %p271 = scmp.lt.s32.totalorder %s268, 47
      %s272 = scalar_select %p271, %s268, 47
      %p273 = scmp.lt.s32.totalorder %s22, 0
      %s274 = scalar_select %p273, %s22, 0
      %s275 = sadd.s32 %s274, %s272
      %s276 = smul.addr %s270, 48
      %s277 = sadd.s32 %s275, %s276
      %s278 = smul.addr %s277, 8
      %s279 = scalar_lea.vmem %s4, %s278
      %s280 = smul.u32 48, %s21
      %v282 = vld [vmem:[%s257] sm:$0xf]
      %v283 = vld [vmem:[%s257 + $0x4] sm:$0xf]
      %v284 = vld [vmem:[%s257 + $0x8] sm:$0xf]
      %v285 = vld [vmem:[%s257 + $0xc] sm:$0xf]
      %v286 = vld [vmem:[%s257 + $0x10] sm:$0xf]
      %v287 = vld [vmem:[%s257 + $0x14] sm:$0xf]
      %v288 = vld [vmem:[%s257 + $0x18] sm:$0xf]
      %v289 = vld [vmem:[%s257 + $0x1c] sm:$0xf]
      %v290 = vld [vmem:[%s257 + $0x20] sm:$0xf]
      %v291 = vld [vmem:[%s257 + $0x24] sm:$0xf]
      %v292 = vld [vmem:[%s257 + $0x28] sm:$0xf]
      %v293 = vld [vmem:[%s257 + $0x2c] sm:$0xf]
      %v294 = vld [vmem:[%s257 + $0x30] sm:$0xf]
      %v295 = vld [vmem:[%s257 + $0x34] sm:$0xf]
      %v296 = vld [vmem:[%s257 + $0x38] sm:$0xf]
      %v297 = vld [vmem:[%s257 + $0x3c] sm:$0xf]
      %v298 = vld [vmem:[%s257 + $0x40] sm:$0xf]
      %v299 = vld [vmem:[%s257 + $0x44] sm:$0xf]
      %v300 = vld [vmem:[%s257 + $0x48] sm:$0xf]
      %v301 = vld [vmem:[%s257 + $0x4c] sm:$0xf]
      %v302 = vld [vmem:[%s257 + $0x50] sm:$0xf]
      %v303 = vld [vmem:[%s257 + $0x54] sm:$0xf]
      %v304 = vld [vmem:[%s257 + $0x58] sm:$0xf]
      %v305 = vld [vmem:[%s257 + $0x5c] sm:$0xf]
      %v306 = vld [vmem:[%s257 + $0x60] sm:$0xf]
      %v307 = vld [vmem:[%s257 + $0x64] sm:$0xf]
      %v308 = vld [vmem:[%s257 + $0x68] sm:$0xf]
      %v309 = vld [vmem:[%s257 + $0x6c] sm:$0xf]
      %v310 = vld [vmem:[%s257 + $0x70] sm:$0xf]
      %v311 = vld [vmem:[%s257 + $0x74] sm:$0xf]
      %v312 = vld [vmem:[%s257 + $0x78] sm:$0xf]
      %v313 = vld [vmem:[%s257 + $0x7c] sm:$0xf]
      %v314 = vld [vmem:[%s257 + $0x80] sm:$0xf]
      %v315 = vld [vmem:[%s257 + $0x84] sm:$0xf]
      %v316 = vld [vmem:[%s257 + $0x88] sm:$0xf]
      %v317 = vld [vmem:[%s257 + $0x8c] sm:$0xf]
      %v318 = vld [vmem:[%s257 + $0x90] sm:$0xf]
      %v319 = vld [vmem:[%s257 + $0x94] sm:$0xf]
      %v320 = vld [vmem:[%s257 + $0x98] sm:$0xf]
      %v321 = vld [vmem:[%s257 + $0x9c] sm:$0xf]
      %v322 = vld [vmem:[%s257 + $0xa0] sm:$0xf]
      %v323 = vld [vmem:[%s257 + $0xa4] sm:$0xf]
      %v324 = vld [vmem:[%s257 + $0xa8] sm:$0xf]
      %v325 = vld [vmem:[%s257 + $0xac] sm:$0xf]
      %v326 = vld [vmem:[%s257 + $0xb0] sm:$0xf]
      %v327 = vld [vmem:[%s257 + $0xb4] sm:$0xf]
      %v328 = vld [vmem:[%s257 + $0xb8] sm:$0xf]
      %v329 = vld [vmem:[%s257 + $0xbc] sm:$0xf]
      %v330 = vld [vmem:[%s257 + $0xc0] sm:$0xf]
      %v331 = vld [vmem:[%s257 + $0xc4] sm:$0xf]
      %v332 = vld [vmem:[%s257 + $0xc8] sm:$0xf]
      %v333 = vld [vmem:[%s257 + $0xcc] sm:$0xf]
      %v334 = vld [vmem:[%s257 + $0xd0] sm:$0xf]
      %v335 = vld [vmem:[%s257 + $0xd4] sm:$0xf]
      %v336 = vld [vmem:[%s257 + $0xd8] sm:$0xf]
      %v385 = vunpack.c.l.b16 %v282
      %v386 = vunpack.c.l.b16 %v283
      %v387 = vunpack.c.l.b16 %v284
      %v388 = vunpack.c.l.b16 %v285
      %v389 = vunpack.c.l.b16 %v286
      %v390 = vunpack.c.l.b16 %v287
      %v391 = vunpack.c.l.b16 %v288
      %v392 = vunpack.c.l.b16 %v289
      %v393 = vunpack.c.l.b16 %v290
      %v394 = vunpack.c.l.b16 %v291
      %v395 = vunpack.c.l.b16 %v292
      %v396 = vunpack.c.l.b16 %v293
      %v397 = vunpack.c.l.b16 %v294
      %v398 = vunpack.c.l.b16 %v295
      %v399 = vunpack.c.l.b16 %v296
      %v400 = vunpack.c.l.b16 %v297
      %v401 = vunpack.c.l.b16 %v298
      %v402 = vunpack.c.l.b16 %v299
      %v403 = vunpack.c.l.b16 %v300
      %v404 = vunpack.c.l.b16 %v301
      %v405 = vunpack.c.l.b16 %v302
      %v406 = vunpack.c.l.b16 %v303
      %v407 = vunpack.c.l.b16 %v304
      %v408 = vunpack.c.l.b16 %v305
      %v409 = vunpack.c.l.b16 %v306
      %v410 = vunpack.c.l.b16 %v307
      %v411 = vunpack.c.l.b16 %v308
      %v412 = vunpack.c.l.b16 %v309
      %v413 = vunpack.c.l.b16 %v310
      %v414 = vunpack.c.l.b16 %v311
      %v415 = vunpack.c.l.b16 %v312
      %v416 = vunpack.c.l.b16 %v313
      %v417 = vunpack.c.l.b16 %v314
      %v418 = vunpack.c.l.b16 %v315
      %v419 = vunpack.c.l.b16 %v316
      %v420 = vunpack.c.l.b16 %v317
      %v421 = vunpack.c.l.b16 %v318
      %v422 = vunpack.c.l.b16 %v319
      %v423 = vunpack.c.l.b16 %v320
      %v424 = vunpack.c.l.b16 %v321
      %v425 = vunpack.c.l.b16 %v322
      %v426 = vunpack.c.l.b16 %v323
      %v427 = vunpack.c.l.b16 %v324
      %v428 = vunpack.c.l.b16 %v325
      %v429 = vunpack.c.l.b16 %v326
      %v430 = vunpack.c.l.b16 %v327
      %v431 = vunpack.c.l.b16 %v328
      %v432 = vunpack.c.l.b16 %v329
      %v433 = vpack.c.b16 %v386, %v385
      %v434 = vpack.c.b16 %v388, %v387
      %v435 = vpack.c.b16 %v390, %v389
      %v436 = vpack.c.b16 %v392, %v391
      %v437 = vpack.c.b16 %v394, %v393
      %v438 = vpack.c.b16 %v396, %v395
      %v439 = vpack.c.b16 %v398, %v397
      %v440 = vpack.c.b16 %v400, %v399
      %v441 = vpack.c.b16 %v402, %v401
      %v442 = vpack.c.b16 %v404, %v403
      %v443 = vpack.c.b16 %v406, %v405
      %v444 = vpack.c.b16 %v408, %v407
      %v445 = vpack.c.b16 %v410, %v409
      %v446 = vpack.c.b16 %v412, %v411
      %v447 = vpack.c.b16 %v414, %v413
      %v448 = vpack.c.b16 %v416, %v415
      %v449 = vpack.c.b16 %v418, %v417
      %v450 = vpack.c.b16 %v420, %v419
      %v451 = vpack.c.b16 %v422, %v421
      %v452 = vpack.c.b16 %v424, %v423
      %v453 = vpack.c.b16 %v426, %v425
      %v454 = vpack.c.b16 %v428, %v427
      %v455 = vpack.c.b16 %v430, %v429
      %v456 = vpack.c.b16 %v432, %v431
      %v458 = vunpack.c.l.b16 %v330
      %v459 = vpack.c.b16 %v458, %v458
      %vm460 = vsmask.f32 7424
      %v462 = vshrl.u32 %v433, 16
      %v464 = vshll.u32 %v433, 16
      %v466 = vrot.slane %v464, 1
      %v467 = vor.u32 %v462, %v466
      %v469 = vshll.u32 %v434, 16
      %v471 = vrot.slane %v469, 1
      %v472 = vsel %vm460, %v467, %v471
      %v473 = vshrl.u32 %v434, 16
      %v475 = vor.u32 %v473, %v471
      %v477 = vshll.u32 %v435, 16
      %v479 = vrot.slane %v477, 1
      %v480 = vsel %vm460, %v475, %v479
      %v481 = vshrl.u32 %v435, 16
      %v483 = vor.u32 %v481, %v479
      %v485 = vshll.u32 %v436, 16
      %v487 = vrot.slane %v485, 1
      %v488 = vsel %vm460, %v483, %v487
      %v489 = vshrl.u32 %v436, 16
      %v491 = vor.u32 %v489, %v487
      %v493 = vshll.u32 %v437, 16
      %v495 = vrot.slane %v493, 1
      %v496 = vsel %vm460, %v491, %v495
      %v497 = vshrl.u32 %v437, 16
      %v499 = vor.u32 %v497, %v495
      %v501 = vshll.u32 %v438, 16
      %v503 = vrot.slane %v501, 1
      %v504 = vsel %vm460, %v499, %v503
      %v505 = vshrl.u32 %v438, 16
      %v507 = vor.u32 %v505, %v503
      %v509 = vshll.u32 %v439, 16
      %v511 = vrot.slane %v509, 1
      %v512 = vsel %vm460, %v507, %v511
      %v513 = vshrl.u32 %v439, 16
      %v515 = vor.u32 %v513, %v511
      %v517 = vshll.u32 %v440, 16
      %v519 = vrot.slane %v517, 1
      %v520 = vsel %vm460, %v515, %v519
      %v521 = vshrl.u32 %v440, 16
      %v523 = vor.u32 %v521, %v519
      %v525 = vshll.u32 %v441, 16
      %v527 = vrot.slane %v525, 1
      %v528 = vsel %vm460, %v523, %v527
      %v529 = vshrl.u32 %v441, 16
      %v531 = vor.u32 %v529, %v527
      %v533 = vshll.u32 %v442, 16
      %v535 = vrot.slane %v533, 1
      %v536 = vsel %vm460, %v531, %v535
      %v537 = vshrl.u32 %v442, 16
      %v539 = vor.u32 %v537, %v535
      %v541 = vshll.u32 %v443, 16
      %v543 = vrot.slane %v541, 1
      %v544 = vsel %vm460, %v539, %v543
      %v545 = vshrl.u32 %v443, 16
      %v547 = vor.u32 %v545, %v543
      %v549 = vshll.u32 %v444, 16
      %v551 = vrot.slane %v549, 1
      %v552 = vsel %vm460, %v547, %v551
      %v553 = vshrl.u32 %v444, 16
      %v555 = vor.u32 %v553, %v551
      %v557 = vshll.u32 %v445, 16
      %v559 = vrot.slane %v557, 1
      %v560 = vsel %vm460, %v555, %v559
      %v561 = vshrl.u32 %v445, 16
      %v563 = vor.u32 %v561, %v559
      %v565 = vshll.u32 %v446, 16
      %v567 = vrot.slane %v565, 1
      %v568 = vsel %vm460, %v563, %v567
      %v569 = vshrl.u32 %v446, 16
      %v571 = vor.u32 %v569, %v567
      %v573 = vshll.u32 %v447, 16
      %v575 = vrot.slane %v573, 1
      %v576 = vsel %vm460, %v571, %v575
      %v577 = vshrl.u32 %v447, 16
      %v579 = vor.u32 %v577, %v575
      %v581 = vshll.u32 %v448, 16
      %v583 = vrot.slane %v581, 1
      %v584 = vsel %vm460, %v579, %v583
      %v585 = vshrl.u32 %v448, 16
      %v587 = vor.u32 %v585, %v583
      %v589 = vshll.u32 %v449, 16
      %v591 = vrot.slane %v589, 1
      %v592 = vsel %vm460, %v587, %v591
      %v593 = vshrl.u32 %v449, 16
      %v595 = vor.u32 %v593, %v591
      %v597 = vshll.u32 %v450, 16
      %v599 = vrot.slane %v597, 1
      %v600 = vsel %vm460, %v595, %v599
      %v601 = vshrl.u32 %v450, 16
      %v603 = vor.u32 %v601, %v599
      %v605 = vshll.u32 %v451, 16
      %v607 = vrot.slane %v605, 1
      %v608 = vsel %vm460, %v603, %v607
      %v609 = vshrl.u32 %v451, 16
      %v611 = vor.u32 %v609, %v607
      %v613 = vshll.u32 %v452, 16
      %v615 = vrot.slane %v613, 1
      %v616 = vsel %vm460, %v611, %v615
      %v617 = vshrl.u32 %v452, 16
      %v619 = vor.u32 %v617, %v615
      %v621 = vshll.u32 %v453, 16
      %v623 = vrot.slane %v621, 1
      %v624 = vsel %vm460, %v619, %v623
      %v625 = vshrl.u32 %v453, 16
      %v627 = vor.u32 %v625, %v623
      %v629 = vshll.u32 %v454, 16
      %v631 = vrot.slane %v629, 1
      %v632 = vsel %vm460, %v627, %v631
      %v633 = vshrl.u32 %v454, 16
      %v635 = vor.u32 %v633, %v631
      %v637 = vshll.u32 %v455, 16
      %v639 = vrot.slane %v637, 1
      %v640 = vsel %vm460, %v635, %v639
      %v641 = vshrl.u32 %v455, 16
      %v643 = vor.u32 %v641, %v639
      %v645 = vshll.u32 %v456, 16
      %v647 = vrot.slane %v645, 1
      %v648 = vsel %vm460, %v643, %v647
      %v649 = vshrl.u32 %v456, 16
      %v651 = vor.u32 %v649, %v647
      %v653 = vshll.u32 %v459, 16
      %v655 = vrot.slane %v653, 1
      %v656 = vsel %vm460, %v651, %v655
      %657 = vrot.lane.b32.xlu0 %v472, 4
      %v658 = vpop.permute.xlu0 %657
      %659 = vrot.lane.b32.xlu0 %v480, 4
      %v660 = vpop.permute.xlu0 %659
      %661 = vrot.lane.b32.xlu0 %v488, 4
      %v662 = vpop.permute.xlu0 %661
      %663 = vrot.lane.b32.xlu0 %v496, 4
      %v664 = vpop.permute.xlu0 %663
      %665 = vrot.lane.b32.xlu0 %v504, 4
      %v666 = vpop.permute.xlu0 %665
      %667 = vrot.lane.b32.xlu0 %v512, 4
      %v668 = vpop.permute.xlu0 %667
      %669 = vrot.lane.b32.xlu0 %v520, 4
      %v670 = vpop.permute.xlu0 %669
      %671 = vrot.lane.b32.xlu0 %v528, 4
      %v672 = vpop.permute.xlu0 %671
      %673 = vrot.lane.b32.xlu0 %v536, 4
      %v674 = vpop.permute.xlu0 %673
      %675 = vrot.lane.b32.xlu0 %v544, 4
      %v676 = vpop.permute.xlu0 %675
      %677 = vrot.lane.b32.xlu0 %v552, 4
      %v678 = vpop.permute.xlu0 %677
      %679 = vrot.lane.b32.xlu0 %v560, 4
      %v680 = vpop.permute.xlu0 %679
      %681 = vrot.lane.b32.xlu0 %v568, 4
      %v682 = vpop.permute.xlu0 %681
      %683 = vrot.lane.b32.xlu0 %v576, 4
      %v684 = vpop.permute.xlu0 %683
      %685 = vrot.lane.b32.xlu0 %v584, 4
      %v686 = vpop.permute.xlu0 %685
      %687 = vrot.lane.b32.xlu0 %v592, 4
      %v688 = vpop.permute.xlu0 %687
      %689 = vrot.lane.b32.xlu0 %v600, 4
      %v690 = vpop.permute.xlu0 %689
      %691 = vrot.lane.b32.xlu0 %v608, 4
      %v692 = vpop.permute.xlu0 %691
      %693 = vrot.lane.b32.xlu0 %v616, 4
      %v694 = vpop.permute.xlu0 %693
      %695 = vrot.lane.b32.xlu0 %v624, 4
      %v696 = vpop.permute.xlu0 %695
      %697 = vrot.lane.b32.xlu0 %v632, 4
      %v698 = vpop.permute.xlu0 %697
      %699 = vrot.lane.b32.xlu0 %v640, 4
      %v700 = vpop.permute.xlu0 %699
      %701 = vrot.lane.b32.xlu0 %v648, 4
      %v702 = vpop.permute.xlu0 %701
      %703 = vrot.lane.b32.xlu0 %v656, 4
      %v704 = vpop.permute.xlu0 %703
      %vm705 = vcmask 1046528
      %v706 = vrot.slane %v433, 1
      %v707 = vrot.slane %v434, 1
      %v708 = vsel %vm705, %v706, %v707
      %v709 = vrot.slane %v435, 1
      %v710 = vsel %vm705, %v707, %v709
      %v711 = vrot.slane %v436, 1
      %v712 = vsel %vm705, %v709, %v711
      %v713 = vrot.slane %v437, 1
      %v714 = vsel %vm705, %v711, %v713
      %v715 = vrot.slane %v438, 1
      %v716 = vsel %vm705, %v713, %v715
      %v717 = vrot.slane %v439, 1
      %v718 = vsel %vm705, %v715, %v717
      %v719 = vrot.slane %v440, 1
      %v720 = vsel %vm705, %v717, %v719
      %v721 = vrot.slane %v441, 1
      %v722 = vsel %vm705, %v719, %v721
      %v723 = vrot.slane %v442, 1
      %v724 = vsel %vm705, %v721, %v723
      %v725 = vrot.slane %v443, 1
      %v726 = vsel %vm705, %v723, %v725
      %v727 = vrot.slane %v444, 1
      %v728 = vsel %vm705, %v725, %v727
      %v729 = vrot.slane %v445, 1
      %v730 = vsel %vm705, %v727, %v729
      %v731 = vrot.slane %v446, 1
      %v732 = vsel %vm705, %v729, %v731
      %v733 = vrot.slane %v447, 1
      %v734 = vsel %vm705, %v731, %v733
      %v735 = vrot.slane %v448, 1
      %v736 = vsel %vm705, %v733, %v735
      %v737 = vrot.slane %v449, 1
      %v738 = vsel %vm705, %v735, %v737
      %v739 = vrot.slane %v450, 1
      %v740 = vsel %vm705, %v737, %v739
      %v741 = vrot.slane %v451, 1
      %v742 = vsel %vm705, %v739, %v741
      %v743 = vrot.slane %v452, 1
      %v744 = vsel %vm705, %v741, %v743
      %v745 = vrot.slane %v453, 1
      %v746 = vsel %vm705, %v743, %v745
      %v747 = vrot.slane %v454, 1
      %v748 = vsel %vm705, %v745, %v747
      %v749 = vrot.slane %v455, 1
      %v750 = vsel %vm705, %v747, %v749
      %v751 = vrot.slane %v456, 1
      %v752 = vsel %vm705, %v749, %v751
      %v753 = vrot.slane %v459, 1
      %v754 = vsel %vm705, %v751, %v753
      %755 = vrot.lane.b32.xlu0 %v708, 8
      %v756 = vpop.permute.xlu0 %755
      %757 = vrot.lane.b32.xlu0 %v710, 8
      %v758 = vpop.permute.xlu0 %757
      %759 = vrot.lane.b32.xlu0 %v712, 8
      %v760 = vpop.permute.xlu0 %759
      %761 = vrot.lane.b32.xlu0 %v714, 8
      %v762 = vpop.permute.xlu0 %761
      %763 = vrot.lane.b32.xlu0 %v716, 8
      %v764 = vpop.permute.xlu0 %763
      %765 = vrot.lane.b32.xlu0 %v718, 8
      %v766 = vpop.permute.xlu0 %765
      %767 = vrot.lane.b32.xlu0 %v720, 8
      %v768 = vpop.permute.xlu0 %767
      %769 = vrot.lane.b32.xlu0 %v722, 8
      %v770 = vpop.permute.xlu0 %769
      %771 = vrot.lane.b32.xlu0 %v724, 8
      %v772 = vpop.permute.xlu0 %771
      %773 = vrot.lane.b32.xlu0 %v726, 8
      %v774 = vpop.permute.xlu0 %773
      %775 = vrot.lane.b32.xlu0 %v728, 8
      %v776 = vpop.permute.xlu0 %775
      %777 = vrot.lane.b32.xlu0 %v730, 8
      %v778 = vpop.permute.xlu0 %777
      %779 = vrot.lane.b32.xlu0 %v732, 8
      %v780 = vpop.permute.xlu0 %779
      %781 = vrot.lane.b32.xlu0 %v734, 8
      %v782 = vpop.permute.xlu0 %781
      %783 = vrot.lane.b32.xlu0 %v736, 8
      %v784 = vpop.permute.xlu0 %783
      %785 = vrot.lane.b32.xlu0 %v738, 8
      %v786 = vpop.permute.xlu0 %785
      %787 = vrot.lane.b32.xlu0 %v740, 8
      %v788 = vpop.permute.xlu0 %787
      %789 = vrot.lane.b32.xlu0 %v742, 8
      %v790 = vpop.permute.xlu0 %789
      %791 = vrot.lane.b32.xlu0 %v744, 8
      %v792 = vpop.permute.xlu0 %791
      %793 = vrot.lane.b32.xlu0 %v746, 8
      %v794 = vpop.permute.xlu0 %793
      %795 = vrot.lane.b32.xlu0 %v748, 8
      %v796 = vpop.permute.xlu0 %795
      %797 = vrot.lane.b32.xlu0 %v750, 8
      %v798 = vpop.permute.xlu0 %797
      %799 = vrot.lane.b32.xlu0 %v752, 8
      %v800 = vpop.permute.xlu0 %799
      %801 = vrot.lane.b32.xlu0 %v754, 8
      %v802 = vpop.permute.xlu0 %801
      %v805 = vunpack.c.l.b16 %v331
      %v806 = vunpack.c.l.b16 %v332
      %v807 = vpack.c.b16 %v389, %v388
      %v808 = vpack.c.b16 %v391, %v390
      %v809 = vpack.c.b16 %v393, %v392
      %v810 = vpack.c.b16 %v395, %v394
      %v811 = vpack.c.b16 %v397, %v396
      %v812 = vpack.c.b16 %v399, %v398
      %v813 = vpack.c.b16 %v401, %v400
      %v814 = vpack.c.b16 %v403, %v402
      %v815 = vpack.c.b16 %v405, %v404
      %v816 = vpack.c.b16 %v407, %v406
      %v817 = vpack.c.b16 %v409, %v408
      %v818 = vpack.c.b16 %v411, %v410
      %v819 = vpack.c.b16 %v413, %v412
      %v820 = vpack.c.b16 %v415, %v414
      %v821 = vpack.c.b16 %v417, %v416
      %v822 = vpack.c.b16 %v419, %v418
      %v823 = vpack.c.b16 %v421, %v420
      %v824 = vpack.c.b16 %v423, %v422
      %v825 = vpack.c.b16 %v425, %v424
      %v826 = vpack.c.b16 %v427, %v426
      %v827 = vpack.c.b16 %v429, %v428
      %v828 = vpack.c.b16 %v431, %v430
      %v829 = vpack.c.b16 %v458, %v432
      %v830 = vpack.c.b16 %v806, %v805
      %831 = vrot.lane.b32.xlu0 %v807, 12
      %v832 = vpop.permute.xlu0 %831
      %833 = vrot.lane.b32.xlu0 %v808, 12
      %v834 = vpop.permute.xlu0 %833
      %835 = vrot.lane.b32.xlu0 %v809, 12
      %v836 = vpop.permute.xlu0 %835
      %837 = vrot.lane.b32.xlu0 %v810, 12
      %v838 = vpop.permute.xlu0 %837
      %839 = vrot.lane.b32.xlu0 %v811, 12
      %v840 = vpop.permute.xlu0 %839
      %841 = vrot.lane.b32.xlu0 %v812, 12
      %v842 = vpop.permute.xlu0 %841
      %843 = vrot.lane.b32.xlu0 %v813, 12
      %v844 = vpop.permute.xlu0 %843
      %845 = vrot.lane.b32.xlu0 %v814, 12
      %v846 = vpop.permute.xlu0 %845
      %847 = vrot.lane.b32.xlu0 %v815, 12
      %v848 = vpop.permute.xlu0 %847
      %849 = vrot.lane.b32.xlu0 %v816, 12
      %v850 = vpop.permute.xlu0 %849
      %851 = vrot.lane.b32.xlu0 %v817, 12
      %v852 = vpop.permute.xlu0 %851
      %853 = vrot.lane.b32.xlu0 %v818, 12
      %v854 = vpop.permute.xlu0 %853
      %855 = vrot.lane.b32.xlu0 %v819, 12
      %v856 = vpop.permute.xlu0 %855
      %857 = vrot.lane.b32.xlu0 %v820, 12
      %v858 = vpop.permute.xlu0 %857
      %859 = vrot.lane.b32.xlu0 %v821, 12
      %v860 = vpop.permute.xlu0 %859
      %861 = vrot.lane.b32.xlu0 %v822, 12
      %v862 = vpop.permute.xlu0 %861
      %863 = vrot.lane.b32.xlu0 %v823, 12
      %v864 = vpop.permute.xlu0 %863
      %865 = vrot.lane.b32.xlu0 %v824, 12
      %v866 = vpop.permute.xlu0 %865
      %867 = vrot.lane.b32.xlu0 %v825, 12
      %v868 = vpop.permute.xlu0 %867
      %869 = vrot.lane.b32.xlu0 %v826, 12
      %v870 = vpop.permute.xlu0 %869
      %871 = vrot.lane.b32.xlu0 %v827, 12
      %v872 = vpop.permute.xlu0 %871
      %873 = vrot.lane.b32.xlu0 %v828, 12
      %v874 = vpop.permute.xlu0 %873
      %875 = vrot.lane.b32.xlu0 %v829, 12
      %v876 = vpop.permute.xlu0 %875
      %877 = vrot.lane.b32.xlu0 %v830, 12
      %v878 = vpop.permute.xlu0 %877
      %v880 = vunpack.c.l.b16 %v333
      %v881 = vpack.c.b16 %v880, %v880
      %v883 = vshrl.u32 %v807, 16
      %v885 = vshll.u32 %v807, 16
      %v887 = vrot.slane %v885, 1
      %v888 = vor.u32 %v883, %v887
      %v890 = vshll.u32 %v808, 16
      %v892 = vrot.slane %v890, 1
      %v893 = vsel %vm460, %v888, %v892
      %v894 = vshrl.u32 %v808, 16
      %v896 = vor.u32 %v894, %v892
      %v898 = vshll.u32 %v809, 16
      %v900 = vrot.slane %v898, 1
      %v901 = vsel %vm460, %v896, %v900
      %v902 = vshrl.u32 %v809, 16
      %v904 = vor.u32 %v902, %v900
      %v906 = vshll.u32 %v810, 16
      %v908 = vrot.slane %v906, 1
      %v909 = vsel %vm460, %v904, %v908
      %v910 = vshrl.u32 %v810, 16
      %v912 = vor.u32 %v910, %v908
      %v914 = vshll.u32 %v811, 16
      %v916 = vrot.slane %v914, 1
      %v917 = vsel %vm460, %v912, %v916
      %v918 = vshrl.u32 %v811, 16
      %v920 = vor.u32 %v918, %v916
      %v922 = vshll.u32 %v812, 16
      %v924 = vrot.slane %v922, 1
      %v925 = vsel %vm460, %v920, %v924
      %v926 = vshrl.u32 %v812, 16
      %v928 = vor.u32 %v926, %v924
      %v930 = vshll.u32 %v813, 16
      %v932 = vrot.slane %v930, 1
      %v933 = vsel %vm460, %v928, %v932
      %v934 = vshrl.u32 %v813, 16
      %v936 = vor.u32 %v934, %v932
      %v938 = vshll.u32 %v814, 16
      %v940 = vrot.slane %v938, 1
      %v941 = vsel %vm460, %v936, %v940
      %v942 = vshrl.u32 %v814, 16
      %v944 = vor.u32 %v942, %v940
      %v946 = vshll.u32 %v815, 16
      %v948 = vrot.slane %v946, 1
      %v949 = vsel %vm460, %v944, %v948
      %v950 = vshrl.u32 %v815, 16
      %v952 = vor.u32 %v950, %v948
      %v954 = vshll.u32 %v816, 16
      %v956 = vrot.slane %v954, 1
      %v957 = vsel %vm460, %v952, %v956
      %v958 = vshrl.u32 %v816, 16
      %v960 = vor.u32 %v958, %v956
      %v962 = vshll.u32 %v817, 16
      %v964 = vrot.slane %v962, 1
      %v965 = vsel %vm460, %v960, %v964
      %v966 = vshrl.u32 %v817, 16
      %v968 = vor.u32 %v966, %v964
      %v970 = vshll.u32 %v818, 16
      %v972 = vrot.slane %v970, 1
      %v973 = vsel %vm460, %v968, %v972
      %v974 = vshrl.u32 %v818, 16
      %v976 = vor.u32 %v974, %v972
      %v978 = vshll.u32 %v819, 16
      %v980 = vrot.slane %v978, 1
      %v981 = vsel %vm460, %v976, %v980
      %v982 = vshrl.u32 %v819, 16
      %v984 = vor.u32 %v982, %v980
      %v986 = vshll.u32 %v820, 16
      %v988 = vrot.slane %v986, 1
      %v989 = vsel %vm460, %v984, %v988
      %v990 = vshrl.u32 %v820, 16
      %v992 = vor.u32 %v990, %v988
      %v994 = vshll.u32 %v821, 16
      %v996 = vrot.slane %v994, 1
      %v997 = vsel %vm460, %v992, %v996
      %v998 = vshrl.u32 %v821, 16
      %v1000 = vor.u32 %v998, %v996
      %v1002 = vshll.u32 %v822, 16
      %v1004 = vrot.slane %v1002, 1
      %v1005 = vsel %vm460, %v1000, %v1004
      %v1006 = vshrl.u32 %v822, 16
      %v1008 = vor.u32 %v1006, %v1004
      %v1010 = vshll.u32 %v823, 16
      %v1012 = vrot.slane %v1010, 1
      %v1013 = vsel %vm460, %v1008, %v1012
      %v1014 = vshrl.u32 %v823, 16
      %v1016 = vor.u32 %v1014, %v1012
      %v1018 = vshll.u32 %v824, 16
      %v1020 = vrot.slane %v1018, 1
      %v1021 = vsel %vm460, %v1016, %v1020
      %v1022 = vshrl.u32 %v824, 16
      %v1024 = vor.u32 %v1022, %v1020
      %v1026 = vshll.u32 %v825, 16
      %v1028 = vrot.slane %v1026, 1
      %v1029 = vsel %vm460, %v1024, %v1028
      %v1030 = vshrl.u32 %v825, 16
      %v1032 = vor.u32 %v1030, %v1028
      %v1034 = vshll.u32 %v826, 16
      %v1036 = vrot.slane %v1034, 1
      %v1037 = vsel %vm460, %v1032, %v1036
      %v1038 = vshrl.u32 %v826, 16
      %v1040 = vor.u32 %v1038, %v1036
      %v1042 = vshll.u32 %v827, 16
      %v1044 = vrot.slane %v1042, 1
      %v1045 = vsel %vm460, %v1040, %v1044
      %v1046 = vshrl.u32 %v827, 16
      %v1048 = vor.u32 %v1046, %v1044
      %v1050 = vshll.u32 %v828, 16
      %v1052 = vrot.slane %v1050, 1
      %v1053 = vsel %vm460, %v1048, %v1052
      %v1054 = vshrl.u32 %v828, 16
      %v1056 = vor.u32 %v1054, %v1052
      %v1058 = vshll.u32 %v829, 16
      %v1060 = vrot.slane %v1058, 1
      %v1061 = vsel %vm460, %v1056, %v1060
      %v1062 = vshrl.u32 %v829, 16
      %v1064 = vor.u32 %v1062, %v1060
      %v1066 = vshll.u32 %v830, 16
      %v1068 = vrot.slane %v1066, 1
      %v1069 = vsel %vm460, %v1064, %v1068
      %v1070 = vshrl.u32 %v830, 16
      %v1072 = vor.u32 %v1070, %v1068
      %v1074 = vshll.u32 %v881, 16
      %v1076 = vrot.slane %v1074, 1
      %v1077 = vsel %vm460, %v1072, %v1076
      %1078 = vrot.lane.b32.xlu0 %v893, 16
      %v1079 = vpop.permute.xlu0 %1078
      %1080 = vrot.lane.b32.xlu0 %v901, 16
      %v1081 = vpop.permute.xlu0 %1080
      %1082 = vrot.lane.b32.xlu0 %v909, 16
      %v1083 = vpop.permute.xlu0 %1082
      %1084 = vrot.lane.b32.xlu0 %v917, 16
      %v1085 = vpop.permute.xlu0 %1084
      %1086 = vrot.lane.b32.xlu0 %v925, 16
      %v1087 = vpop.permute.xlu0 %1086
      %1088 = vrot.lane.b32.xlu0 %v933, 16
      %v1089 = vpop.permute.xlu0 %1088
      %1090 = vrot.lane.b32.xlu0 %v941, 16
      %v1091 = vpop.permute.xlu0 %1090
      %1092 = vrot.lane.b32.xlu0 %v949, 16
      %v1093 = vpop.permute.xlu0 %1092
      %1094 = vrot.lane.b32.xlu0 %v957, 16
      %v1095 = vpop.permute.xlu0 %1094
      %1096 = vrot.lane.b32.xlu0 %v965, 16
      %v1097 = vpop.permute.xlu0 %1096
      %1098 = vrot.lane.b32.xlu0 %v973, 16
      %v1099 = vpop.permute.xlu0 %1098
      %1100 = vrot.lane.b32.xlu0 %v981, 16
      %v1101 = vpop.permute.xlu0 %1100
      %1102 = vrot.lane.b32.xlu0 %v989, 16
      %v1103 = vpop.permute.xlu0 %1102
      %1104 = vrot.lane.b32.xlu0 %v997, 16
      %v1105 = vpop.permute.xlu0 %1104
      %1106 = vrot.lane.b32.xlu0 %v1005, 16
      %v1107 = vpop.permute.xlu0 %1106
      %1108 = vrot.lane.b32.xlu0 %v1013, 16
      %v1109 = vpop.permute.xlu0 %1108
      %1110 = vrot.lane.b32.xlu0 %v1021, 16
      %v1111 = vpop.permute.xlu0 %1110
      %1112 = vrot.lane.b32.xlu0 %v1029, 16
      %v1113 = vpop.permute.xlu0 %1112
      %1114 = vrot.lane.b32.xlu0 %v1037, 16
      %v1115 = vpop.permute.xlu0 %1114
      %1116 = vrot.lane.b32.xlu0 %v1045, 16
      %v1117 = vpop.permute.xlu0 %1116
      %1118 = vrot.lane.b32.xlu0 %v1053, 16
      %v1119 = vpop.permute.xlu0 %1118
      %1120 = vrot.lane.b32.xlu0 %v1061, 16
      %v1121 = vpop.permute.xlu0 %1120
      %1122 = vrot.lane.b32.xlu0 %v1069, 16
      %v1123 = vpop.permute.xlu0 %1122
      %1124 = vrot.lane.b32.xlu0 %v1077, 16
      %v1125 = vpop.permute.xlu0 %1124
      %v1126 = vrot.slane %v807, 1
      %v1127 = vrot.slane %v808, 1
      %v1128 = vsel %vm705, %v1126, %v1127
      %v1129 = vrot.slane %v809, 1
      %v1130 = vsel %vm705, %v1127, %v1129
      %v1131 = vrot.slane %v810, 1
      %v1132 = vsel %vm705, %v1129, %v1131
      %v1133 = vrot.slane %v811, 1
      %v1134 = vsel %vm705, %v1131, %v1133
      %v1135 = vrot.slane %v812, 1
      %v1136 = vsel %vm705, %v1133, %v1135
      %v1137 = vrot.slane %v813, 1
      %v1138 = vsel %vm705, %v1135, %v1137
      %v1139 = vrot.slane %v814, 1
      %v1140 = vsel %vm705, %v1137, %v1139
      %v1141 = vrot.slane %v815, 1
      %v1142 = vsel %vm705, %v1139, %v1141
      %v1143 = vrot.slane %v816, 1
      %v1144 = vsel %vm705, %v1141, %v1143
      %v1145 = vrot.slane %v817, 1
      %v1146 = vsel %vm705, %v1143, %v1145
      %v1147 = vrot.slane %v818, 1
      %v1148 = vsel %vm705, %v1145, %v1147
      %v1149 = vrot.slane %v819, 1
      %v1150 = vsel %vm705, %v1147, %v1149
      %v1151 = vrot.slane %v820, 1
      %v1152 = vsel %vm705, %v1149, %v1151
      %v1153 = vrot.slane %v821, 1
      %v1154 = vsel %vm705, %v1151, %v1153
      %v1155 = vrot.slane %v822, 1
      %v1156 = vsel %vm705, %v1153, %v1155
      %v1157 = vrot.slane %v823, 1
      %v1158 = vsel %vm705, %v1155, %v1157
      %v1159 = vrot.slane %v824, 1
      %v1160 = vsel %vm705, %v1157, %v1159
      %v1161 = vrot.slane %v825, 1
      %v1162 = vsel %vm705, %v1159, %v1161
      %v1163 = vrot.slane %v826, 1
      %v1164 = vsel %vm705, %v1161, %v1163
      %v1165 = vrot.slane %v827, 1
      %v1166 = vsel %vm705, %v1163, %v1165
      %v1167 = vrot.slane %v828, 1
      %v1168 = vsel %vm705, %v1165, %v1167
      %v1169 = vrot.slane %v829, 1
      %v1170 = vsel %vm705, %v1167, %v1169
      %v1171 = vrot.slane %v830, 1
      %v1172 = vsel %vm705, %v1169, %v1171
      %v1173 = vrot.slane %v881, 1
      %v1174 = vsel %vm705, %v1171, %v1173
      %1175 = vrot.lane.b32.xlu0 %v1128, 20
      %v1176 = vpop.permute.xlu0 %1175
      %1177 = vrot.lane.b32.xlu0 %v1130, 20
      %v1178 = vpop.permute.xlu0 %1177
      %1179 = vrot.lane.b32.xlu0 %v1132, 20
      %v1180 = vpop.permute.xlu0 %1179
      %1181 = vrot.lane.b32.xlu0 %v1134, 20
      %v1182 = vpop.permute.xlu0 %1181
      %1183 = vrot.lane.b32.xlu0 %v1136, 20
      %v1184 = vpop.permute.xlu0 %1183
      %1185 = vrot.lane.b32.xlu0 %v1138, 20
      %v1186 = vpop.permute.xlu0 %1185
      %1187 = vrot.lane.b32.xlu0 %v1140, 20
      %v1188 = vpop.permute.xlu0 %1187
      %1189 = vrot.lane.b32.xlu0 %v1142, 20
      %v1190 = vpop.permute.xlu0 %1189
      %1191 = vrot.lane.b32.xlu0 %v1144, 20
      %v1192 = vpop.permute.xlu0 %1191
      %1193 = vrot.lane.b32.xlu0 %v1146, 20
      %v1194 = vpop.permute.xlu0 %1193
      %1195 = vrot.lane.b32.xlu0 %v1148, 20
      %v1196 = vpop.permute.xlu0 %1195
      %1197 = vrot.lane.b32.xlu0 %v1150, 20
      %v1198 = vpop.permute.xlu0 %1197
      %1199 = vrot.lane.b32.xlu0 %v1152, 20
      %v1200 = vpop.permute.xlu0 %1199
      %1201 = vrot.lane.b32.xlu0 %v1154, 20
      %v1202 = vpop.permute.xlu0 %1201
      %1203 = vrot.lane.b32.xlu0 %v1156, 20
      %v1204 = vpop.permute.xlu0 %1203
      %1205 = vrot.lane.b32.xlu0 %v1158, 20
      %v1206 = vpop.permute.xlu0 %1205
      %1207 = vrot.lane.b32.xlu0 %v1160, 20
      %v1208 = vpop.permute.xlu0 %1207
      %1209 = vrot.lane.b32.xlu0 %v1162, 20
      %v1210 = vpop.permute.xlu0 %1209
      %1211 = vrot.lane.b32.xlu0 %v1164, 20
      %v1212 = vpop.permute.xlu0 %1211
      %1213 = vrot.lane.b32.xlu0 %v1166, 20
      %v1214 = vpop.permute.xlu0 %1213
      %1215 = vrot.lane.b32.xlu0 %v1168, 20
      %v1216 = vpop.permute.xlu0 %1215
      %1217 = vrot.lane.b32.xlu0 %v1170, 20
      %v1218 = vpop.permute.xlu0 %1217
      %1219 = vrot.lane.b32.xlu0 %v1172, 20
      %v1220 = vpop.permute.xlu0 %1219
      %1221 = vrot.lane.b32.xlu0 %v1174, 20
      %v1222 = vpop.permute.xlu0 %1221
      %v1225 = vunpack.c.l.b16 %v334
      %v1226 = vunpack.c.l.b16 %v335
      %v1227 = vpack.c.b16 %v805, %v458
      %v1228 = vpack.c.b16 %v880, %v806
      %v1229 = vpack.c.b16 %v1226, %v1225
      %1230 = vrot.lane.b32.xlu0 %v436, 24
      %v1231 = vpop.permute.xlu0 %1230
      %1232 = vrot.lane.b32.xlu0 %v437, 24
      %v1233 = vpop.permute.xlu0 %1232
      %1234 = vrot.lane.b32.xlu0 %v438, 24
      %v1235 = vpop.permute.xlu0 %1234
      %1236 = vrot.lane.b32.xlu0 %v439, 24
      %v1237 = vpop.permute.xlu0 %1236
      %1238 = vrot.lane.b32.xlu0 %v440, 24
      %v1239 = vpop.permute.xlu0 %1238
      %1240 = vrot.lane.b32.xlu0 %v441, 24
      %v1241 = vpop.permute.xlu0 %1240
      %1242 = vrot.lane.b32.xlu0 %v442, 24
      %v1243 = vpop.permute.xlu0 %1242
      %1244 = vrot.lane.b32.xlu0 %v443, 24
      %v1245 = vpop.permute.xlu0 %1244
      %1246 = vrot.lane.b32.xlu0 %v444, 24
      %v1247 = vpop.permute.xlu0 %1246
      %1248 = vrot.lane.b32.xlu0 %v445, 24
      %v1249 = vpop.permute.xlu0 %1248
      %1250 = vrot.lane.b32.xlu0 %v446, 24
      %v1251 = vpop.permute.xlu0 %1250
      %1252 = vrot.lane.b32.xlu0 %v447, 24
      %v1253 = vpop.permute.xlu0 %1252
      %1254 = vrot.lane.b32.xlu0 %v448, 24
      %v1255 = vpop.permute.xlu0 %1254
      %1256 = vrot.lane.b32.xlu0 %v449, 24
      %v1257 = vpop.permute.xlu0 %1256
      %1258 = vrot.lane.b32.xlu0 %v450, 24
      %v1259 = vpop.permute.xlu0 %1258
      %1260 = vrot.lane.b32.xlu0 %v451, 24
      %v1261 = vpop.permute.xlu0 %1260
      %1262 = vrot.lane.b32.xlu0 %v452, 24
      %v1263 = vpop.permute.xlu0 %1262
      %1264 = vrot.lane.b32.xlu0 %v453, 24
      %v1265 = vpop.permute.xlu0 %1264
      %1266 = vrot.lane.b32.xlu0 %v454, 24
      %v1267 = vpop.permute.xlu0 %1266
      %1268 = vrot.lane.b32.xlu0 %v455, 24
      %v1269 = vpop.permute.xlu0 %1268
      %1270 = vrot.lane.b32.xlu0 %v456, 24
      %v1271 = vpop.permute.xlu0 %1270
      %1272 = vrot.lane.b32.xlu0 %v1227, 24
      %v1273 = vpop.permute.xlu0 %1272
      %1274 = vrot.lane.b32.xlu0 %v1228, 24
      %v1275 = vpop.permute.xlu0 %1274
      %1276 = vrot.lane.b32.xlu0 %v1229, 24
      %v1277 = vpop.permute.xlu0 %1276
      %v1279 = vunpack.c.l.b16 %v336
      %v1280 = vpack.c.b16 %v1279, %v1279
      %v1282 = vshll.u32 %v1227, 16
      %v1284 = vrot.slane %v1282, 1
      %v1285 = vsel %vm460, %v651, %v1284
      %v1286 = vshrl.u32 %v1227, 16
      %v1288 = vor.u32 %v1286, %v1284
      %v1290 = vshll.u32 %v1228, 16
      %v1292 = vrot.slane %v1290, 1
      %v1293 = vsel %vm460, %v1288, %v1292
      %v1294 = vshrl.u32 %v1228, 16
      %v1296 = vor.u32 %v1294, %v1292
      %v1298 = vshll.u32 %v1229, 16
      %v1300 = vrot.slane %v1298, 1
      %v1301 = vsel %vm460, %v1296, %v1300
      %v1302 = vshrl.u32 %v1229, 16
      %v1304 = vor.u32 %v1302, %v1300
      %v1306 = vshll.u32 %v1280, 16
      %v1308 = vrot.slane %v1306, 1
      %v1309 = vsel %vm460, %v1304, %v1308
      %1310 = vrot.lane.b32.xlu0 %v496, 28
      %v1311 = vpop.permute.xlu0 %1310
      %1312 = vrot.lane.b32.xlu0 %v504, 28
      %v1313 = vpop.permute.xlu0 %1312
      %1314 = vrot.lane.b32.xlu0 %v512, 28
      %v1315 = vpop.permute.xlu0 %1314
      %1316 = vrot.lane.b32.xlu0 %v520, 28
      %v1317 = vpop.permute.xlu0 %1316
      %1318 = vrot.lane.b32.xlu0 %v528, 28
      %v1319 = vpop.permute.xlu0 %1318
      %1320 = vrot.lane.b32.xlu0 %v536, 28
      %v1321 = vpop.permute.xlu0 %1320
      %1322 = vrot.lane.b32.xlu0 %v544, 28
      %v1323 = vpop.permute.xlu0 %1322
      %1324 = vrot.lane.b32.xlu0 %v552, 28
      %v1325 = vpop.permute.xlu0 %1324
      %1326 = vrot.lane.b32.xlu0 %v560, 28
      %v1327 = vpop.permute.xlu0 %1326
      %1328 = vrot.lane.b32.xlu0 %v568, 28
      %v1329 = vpop.permute.xlu0 %1328
      %1330 = vrot.lane.b32.xlu0 %v576, 28
      %v1331 = vpop.permute.xlu0 %1330
      %1332 = vrot.lane.b32.xlu0 %v584, 28
      %v1333 = vpop.permute.xlu0 %1332
      %1334 = vrot.lane.b32.xlu0 %v592, 28
      %v1335 = vpop.permute.xlu0 %1334
      %1336 = vrot.lane.b32.xlu0 %v600, 28
      %v1337 = vpop.permute.xlu0 %1336
      %1338 = vrot.lane.b32.xlu0 %v608, 28
      %v1339 = vpop.permute.xlu0 %1338
      %1340 = vrot.lane.b32.xlu0 %v616, 28
      %v1341 = vpop.permute.xlu0 %1340
      %1342 = vrot.lane.b32.xlu0 %v624, 28
      %v1343 = vpop.permute.xlu0 %1342
      %1344 = vrot.lane.b32.xlu0 %v632, 28
      %v1345 = vpop.permute.xlu0 %1344
      %1346 = vrot.lane.b32.xlu0 %v640, 28
      %v1347 = vpop.permute.xlu0 %1346
      %1348 = vrot.lane.b32.xlu0 %v648, 28
      %v1349 = vpop.permute.xlu0 %1348
      %1350 = vrot.lane.b32.xlu0 %v1285, 28
      %v1351 = vpop.permute.xlu0 %1350
      %1352 = vrot.lane.b32.xlu0 %v1293, 28
      %v1353 = vpop.permute.xlu0 %1352
      %1354 = vrot.lane.b32.xlu0 %v1301, 28
      %v1355 = vpop.permute.xlu0 %1354
      %1356 = vrot.lane.b32.xlu0 %v1309, 28
      %v1357 = vpop.permute.xlu0 %1356
      %v1358 = vrot.slane %v1227, 1
      %v1359 = vsel %vm705, %v751, %v1358
      %v1360 = vrot.slane %v1228, 1
      %v1361 = vsel %vm705, %v1358, %v1360
      %v1362 = vrot.slane %v1229, 1
      %v1363 = vsel %vm705, %v1360, %v1362
      %v1364 = vrot.slane %v1280, 1
      %v1365 = vsel %vm705, %v1362, %v1364
      %1366 = vrot.lane.b32.xlu0 %v714, 32
      %v1367 = vpop.permute.xlu0 %1366
      %1368 = vrot.lane.b32.xlu0 %v716, 32
      %v1369 = vpop.permute.xlu0 %1368
      %1370 = vrot.lane.b32.xlu0 %v718, 32
      %v1371 = vpop.permute.xlu0 %1370
      %1372 = vrot.lane.b32.xlu0 %v720, 32
      %v1373 = vpop.permute.xlu0 %1372
      %1374 = vrot.lane.b32.xlu0 %v722, 32
      %v1375 = vpop.permute.xlu0 %1374
      %1376 = vrot.lane.b32.xlu0 %v724, 32
      %v1377 = vpop.permute.xlu0 %1376
      %1378 = vrot.lane.b32.xlu0 %v726, 32
      %v1379 = vpop.permute.xlu0 %1378
      %1380 = vrot.lane.b32.xlu0 %v728, 32
      %v1381 = vpop.permute.xlu0 %1380
      %1382 = vrot.lane.b32.xlu0 %v730, 32
      %v1383 = vpop.permute.xlu0 %1382
      %1384 = vrot.lane.b32.xlu0 %v732, 32
      %v1385 = vpop.permute.xlu0 %1384
      %1386 = vrot.lane.b32.xlu0 %v734, 32
      %v1387 = vpop.permute.xlu0 %1386
      %1388 = vrot.lane.b32.xlu0 %v736, 32
      %v1389 = vpop.permute.xlu0 %1388
      %1390 = vrot.lane.b32.xlu0 %v738, 32
      %v1391 = vpop.permute.xlu0 %1390
      %1392 = vrot.lane.b32.xlu0 %v740, 32
      %v1393 = vpop.permute.xlu0 %1392
      %1394 = vrot.lane.b32.xlu0 %v742, 32
      %v1395 = vpop.permute.xlu0 %1394
      %1396 = vrot.lane.b32.xlu0 %v744, 32
      %v1397 = vpop.permute.xlu0 %1396
      %1398 = vrot.lane.b32.xlu0 %v746, 32
      %v1399 = vpop.permute.xlu0 %1398
      %1400 = vrot.lane.b32.xlu0 %v748, 32
      %v1401 = vpop.permute.xlu0 %1400
      %1402 = vrot.lane.b32.xlu0 %v750, 32
      %v1403 = vpop.permute.xlu0 %1402
      %1404 = vrot.lane.b32.xlu0 %v752, 32
      %v1405 = vpop.permute.xlu0 %1404
      %1406 = vrot.lane.b32.xlu0 %v1359, 32
      %v1407 = vpop.permute.xlu0 %1406
      %1408 = vrot.lane.b32.xlu0 %v1361, 32
      %v1409 = vpop.permute.xlu0 %1408
      %1410 = vrot.lane.b32.xlu0 %v1363, 32
      %v1411 = vpop.permute.xlu0 %1410
      %1412 = vrot.lane.b32.xlu0 %v1365, 32
      %v1413 = vpop.permute.xlu0 %1412
      %vm1414 = vcmask 31744
      %v1416 = vsel %vm1414, %v433, %v658
      %v1418 = vsel %vm1414, %v434, %v660
      %v1420 = vsel %vm1414, %v435, %v662
      %v1422 = vsel %vm1414, %v436, %v664
      %v1424 = vsel %vm1414, %v437, %v666
      %v1426 = vsel %vm1414, %v438, %v668
      %v1428 = vsel %vm1414, %v439, %v670
      %v1430 = vsel %vm1414, %v440, %v672
      %v1432 = vsel %vm1414, %v441, %v674
      %v1434 = vsel %vm1414, %v442, %v676
      %v1436 = vsel %vm1414, %v443, %v678
      %v1438 = vsel %vm1414, %v444, %v680
      %v1440 = vsel %vm1414, %v445, %v682
      %v1442 = vsel %vm1414, %v446, %v684
      %v1444 = vsel %vm1414, %v447, %v686
      %v1446 = vsel %vm1414, %v448, %v688
      %v1448 = vsel %vm1414, %v449, %v690
      %v1450 = vsel %vm1414, %v450, %v692
      %v1452 = vsel %vm1414, %v451, %v694
      %v1454 = vsel %vm1414, %v452, %v696
      %v1456 = vsel %vm1414, %v453, %v698
      %v1458 = vsel %vm1414, %v454, %v700
      %v1460 = vsel %vm1414, %v455, %v702
      %v1462 = vsel %vm1414, %v456, %v704
      %vm1463 = vcmask 64512
      %v1465 = vsel %vm1463, %v1416, %v756
      %v1467 = vsel %vm1463, %v1418, %v758
      %v1469 = vsel %vm1463, %v1420, %v760
      %v1471 = vsel %vm1463, %v1422, %v762
      %v1473 = vsel %vm1463, %v1424, %v764
      %v1475 = vsel %vm1463, %v1426, %v766
      %v1477 = vsel %vm1463, %v1428, %v768
      %v1479 = vsel %vm1463, %v1430, %v770
      %v1481 = vsel %vm1463, %v1432, %v772
      %v1483 = vsel %vm1463, %v1434, %v774
      %v1485 = vsel %vm1463, %v1436, %v776
      %v1487 = vsel %vm1463, %v1438, %v778
      %v1489 = vsel %vm1463, %v1440, %v780
      %v1491 = vsel %vm1463, %v1442, %v782
      %v1493 = vsel %vm1463, %v1444, %v784
      %v1495 = vsel %vm1463, %v1446, %v786
      %v1497 = vsel %vm1463, %v1448, %v788
      %v1499 = vsel %vm1463, %v1450, %v790
      %v1501 = vsel %vm1463, %v1452, %v792
      %v1503 = vsel %vm1463, %v1454, %v794
      %v1505 = vsel %vm1463, %v1456, %v796
      %v1507 = vsel %vm1463, %v1458, %v798
      %v1509 = vsel %vm1463, %v1460, %v800
      %v1511 = vsel %vm1463, %v1462, %v802
      %vm1512 = vcmask 97280
      %v1514 = vsel %vm1512, %v1465, %v832
      %v1516 = vsel %vm1512, %v1467, %v834
      %v1518 = vsel %vm1512, %v1469, %v836
      %v1520 = vsel %vm1512, %v1471, %v838
      %v1522 = vsel %vm1512, %v1473, %v840
      %v1524 = vsel %vm1512, %v1475, %v842
      %v1526 = vsel %vm1512, %v1477, %v844
      %v1528 = vsel %vm1512, %v1479, %v846
      %v1530 = vsel %vm1512, %v1481, %v848
      %v1532 = vsel %vm1512, %v1483, %v850
      %v1534 = vsel %vm1512, %v1485, %v852
      %v1536 = vsel %vm1512, %v1487, %v854
      %v1538 = vsel %vm1512, %v1489, %v856
      %v1540 = vsel %vm1512, %v1491, %v858
      %v1542 = vsel %vm1512, %v1493, %v860
      %v1544 = vsel %vm1512, %v1495, %v862
      %v1546 = vsel %vm1512, %v1497, %v864
      %v1548 = vsel %vm1512, %v1499, %v866
      %v1550 = vsel %vm1512, %v1501, %v868
      %v1552 = vsel %vm1512, %v1503, %v870
      %v1554 = vsel %vm1512, %v1505, %v872
      %v1556 = vsel %vm1512, %v1507, %v874
      %v1558 = vsel %vm1512, %v1509, %v876
      %v1560 = vsel %vm1512, %v1511, %v878
      %vm1561 = vcmask 130048
      %v1563 = vsel %vm1561, %v1514, %v1079
      %v1565 = vsel %vm1561, %v1516, %v1081
      %v1567 = vsel %vm1561, %v1518, %v1083
      %v1569 = vsel %vm1561, %v1520, %v1085
      %v1571 = vsel %vm1561, %v1522, %v1087
      %v1573 = vsel %vm1561, %v1524, %v1089
      %v1575 = vsel %vm1561, %v1526, %v1091
      %v1577 = vsel %vm1561, %v1528, %v1093
      %v1579 = vsel %vm1561, %v1530, %v1095
      %v1581 = vsel %vm1561, %v1532, %v1097
      %v1583 = vsel %vm1561, %v1534, %v1099
      %v1585 = vsel %vm1561, %v1536, %v1101
      %v1587 = vsel %vm1561, %v1538, %v1103
      %v1589 = vsel %vm1561, %v1540, %v1105
      %v1591 = vsel %vm1561, %v1542, %v1107
      %v1593 = vsel %vm1561, %v1544, %v1109
      %v1595 = vsel %vm1561, %v1546, %v1111
      %v1597 = vsel %vm1561, %v1548, %v1113
      %v1599 = vsel %vm1561, %v1550, %v1115
      %v1601 = vsel %vm1561, %v1552, %v1117
      %v1603 = vsel %vm1561, %v1554, %v1119
      %v1605 = vsel %vm1561, %v1556, %v1121
      %v1607 = vsel %vm1561, %v1558, %v1123
      %v1609 = vsel %vm1561, %v1560, %v1125
      %vm1610 = vcmask 162816
      %v1612 = vsel %vm1610, %v1563, %v1176
      %v1614 = vsel %vm1610, %v1565, %v1178
      %v1616 = vsel %vm1610, %v1567, %v1180
      %v1618 = vsel %vm1610, %v1569, %v1182
      %v1620 = vsel %vm1610, %v1571, %v1184
      %v1622 = vsel %vm1610, %v1573, %v1186
      %v1624 = vsel %vm1610, %v1575, %v1188
      %v1626 = vsel %vm1610, %v1577, %v1190
      %v1628 = vsel %vm1610, %v1579, %v1192
      %v1630 = vsel %vm1610, %v1581, %v1194
      %v1632 = vsel %vm1610, %v1583, %v1196
      %v1634 = vsel %vm1610, %v1585, %v1198
      %v1636 = vsel %vm1610, %v1587, %v1200
      %v1638 = vsel %vm1610, %v1589, %v1202
      %v1640 = vsel %vm1610, %v1591, %v1204
      %v1642 = vsel %vm1610, %v1593, %v1206
      %v1644 = vsel %vm1610, %v1595, %v1208
      %v1646 = vsel %vm1610, %v1597, %v1210
      %v1648 = vsel %vm1610, %v1599, %v1212
      %v1650 = vsel %vm1610, %v1601, %v1214
      %v1652 = vsel %vm1610, %v1603, %v1216
      %v1654 = vsel %vm1610, %v1605, %v1218
      %v1656 = vsel %vm1610, %v1607, %v1220
      %v1658 = vsel %vm1610, %v1609, %v1222
      %vm1659 = vcmask 195584
      %v1661 = vsel %vm1659, %v1612, %v1231
      %v1663 = vsel %vm1659, %v1614, %v1233
      %v1665 = vsel %vm1659, %v1616, %v1235
      %v1667 = vsel %vm1659, %v1618, %v1237
      %v1669 = vsel %vm1659, %v1620, %v1239
      %v1671 = vsel %vm1659, %v1622, %v1241
      %v1673 = vsel %vm1659, %v1624, %v1243
      %v1675 = vsel %vm1659, %v1626, %v1245
      %v1677 = vsel %vm1659, %v1628, %v1247
      %v1679 = vsel %vm1659, %v1630, %v1249
      %v1681 = vsel %vm1659, %v1632, %v1251
      %v1683 = vsel %vm1659, %v1634, %v1253
      %v1685 = vsel %vm1659, %v1636, %v1255
      %v1687 = vsel %vm1659, %v1638, %v1257
      %v1689 = vsel %vm1659, %v1640, %v1259
      %v1691 = vsel %vm1659, %v1642, %v1261
      %v1693 = vsel %vm1659, %v1644, %v1263
      %v1695 = vsel %vm1659, %v1646, %v1265
      %v1697 = vsel %vm1659, %v1648, %v1267
      %v1699 = vsel %vm1659, %v1650, %v1269
      %v1701 = vsel %vm1659, %v1652, %v1271
      %v1703 = vsel %vm1659, %v1654, %v1273
      %v1705 = vsel %vm1659, %v1656, %v1275
      %v1707 = vsel %vm1659, %v1658, %v1277
      %vm1708 = vcmask 228352
      %v1710 = vsel %vm1708, %v1661, %v1311
      %v1712 = vsel %vm1708, %v1663, %v1313
      %v1714 = vsel %vm1708, %v1665, %v1315
      %v1716 = vsel %vm1708, %v1667, %v1317
      %v1718 = vsel %vm1708, %v1669, %v1319
      %v1720 = vsel %vm1708, %v1671, %v1321
      %v1722 = vsel %vm1708, %v1673, %v1323
      %v1724 = vsel %vm1708, %v1675, %v1325
      %v1726 = vsel %vm1708, %v1677, %v1327
      %v1728 = vsel %vm1708, %v1679, %v1329
      %v1730 = vsel %vm1708, %v1681, %v1331
      %v1732 = vsel %vm1708, %v1683, %v1333
      %v1734 = vsel %vm1708, %v1685, %v1335
      %v1736 = vsel %vm1708, %v1687, %v1337
      %v1738 = vsel %vm1708, %v1689, %v1339
      %v1740 = vsel %vm1708, %v1691, %v1341
      %v1742 = vsel %vm1708, %v1693, %v1343
      %v1744 = vsel %vm1708, %v1695, %v1345
      %v1746 = vsel %vm1708, %v1697, %v1347
      %v1748 = vsel %vm1708, %v1699, %v1349
      %v1750 = vsel %vm1708, %v1701, %v1351
      %v1752 = vsel %vm1708, %v1703, %v1353
      %v1754 = vsel %vm1708, %v1705, %v1355
      %v1756 = vsel %vm1708, %v1707, %v1357
      %vm1757 = vcmask 261120
      %v1759 = vsel %vm1757, %v1710, %v1367
      %v1761 = vsel %vm1757, %v1712, %v1369
      %v1763 = vsel %vm1757, %v1714, %v1371
      %v1765 = vsel %vm1757, %v1716, %v1373
      %v1767 = vsel %vm1757, %v1718, %v1375
      %v1769 = vsel %vm1757, %v1720, %v1377
      %v1771 = vsel %vm1757, %v1722, %v1379
      %v1773 = vsel %vm1757, %v1724, %v1381
      %v1775 = vsel %vm1757, %v1726, %v1383
      %v1777 = vsel %vm1757, %v1728, %v1385
      %v1779 = vsel %vm1757, %v1730, %v1387
      %v1781 = vsel %vm1757, %v1732, %v1389
      %v1783 = vsel %vm1757, %v1734, %v1391
      %v1785 = vsel %vm1757, %v1736, %v1393
      %v1787 = vsel %vm1757, %v1738, %v1395
      %v1789 = vsel %vm1757, %v1740, %v1397
      %v1791 = vsel %vm1757, %v1742, %v1399
      %v1793 = vsel %vm1757, %v1744, %v1401
      %v1795 = vsel %vm1757, %v1746, %v1403
      %v1797 = vsel %vm1757, %v1748, %v1405
      %v1799 = vsel %vm1757, %v1750, %v1407
      %v1801 = vsel %vm1757, %v1752, %v1409
      %v1803 = vsel %vm1757, %v1754, %v1411
      %v1805 = vsel %vm1757, %v1756, %v1413
      %v1806 = vld [vmem:[%s261] sm:$0xf]
      %v1807 = vld [vmem:[%s261 + $0x4] sm:$0xf]
      %v1808 = vld [vmem:[%s261 + $0x8] sm:$0xf]
      %v1809 = vld [vmem:[%s261 + $0xc] sm:$0xf]
      %v1810 = vld [vmem:[%s261 + $0x10] sm:$0x3]
      %v1816 = vunpack.c.l.b16 %v1806
      %v1817 = vunpack.c.l.b16 %v1807
      %v1818 = vunpack.c.l.b16 %v1808
      %v1819 = vunpack.c.l.b16 %v1809
      %v1820 = vunpack.c.l.b16 %v1810
      %v1821 = vpack.c.b16 %v1817, %v1816
      %v1822 = vpack.c.b16 %v1819, %v1818
      %v1823 = vpack.c.b16 %v1820, %v1820
      %vm1826 = vcmask 293888
      %v1827 = vsel %vm1826, %v1759, 0
      %v1829 = vsel %vm1826, %v1761, 0
      %v1831 = vsel %vm1826, %v1763, 0
      %v1833 = vsel %vm1826, %v1765, 0
      %v1835 = vsel %vm1826, %v1767, 0
      %v1837 = vsel %vm1826, %v1769, 0
      %v1839 = vsel %vm1826, %v1771, 0
      %v1841 = vsel %vm1826, %v1773, 0
      %v1843 = vsel %vm1826, %v1775, 0
      %v1845 = vsel %vm1826, %v1777, 0
      %v1847 = vsel %vm1826, %v1779, 0
      %v1849 = vsel %vm1826, %v1781, 0
      %v1851 = vsel %vm1826, %v1783, 0
      %v1853 = vsel %vm1826, %v1785, 0
      %v1855 = vsel %vm1826, %v1787, 0
      %v1857 = vsel %vm1826, %v1789, 0
      %v1859 = vsel %vm1826, %v1791, 0
      %v1861 = vsel %vm1826, %v1793, 0
      %v1863 = vsel %vm1826, %v1795, 0
      %v1865 = vsel %vm1826, %v1797, 0
      %v1867 = vsel %vm1826, %v1799, 0
      %v1869 = vsel %vm1826, %v1801, 0
      %v1871 = vsel %vm1826, %v1803, 0
      %v1873 = vsel %vm1826, %v1805, 0
      %vm1875 = vcmask 1041408
      %v1877 = vsel %vm1875, %v1823, 0
      %1879 = vmatprep.subr.bf16.mxu0 0
      %1880 = vmatpush1.bf16.msra.mxu0 0
      %1881 = vmatprep.subr.bf16.mxu0 0
      %1882 = vmatpush1.bf16.msra.mxu0 0
      %1883 = vmatprep.subr.bf16.mxu0 0
      %1884 = vmatpush1.bf16.msra.mxu0 0
      %1885 = vmatprep.subr.bf16.mxu0 0
      %1886 = vmatpush1.bf16.msra.mxu0 0
      %1887 = vmatprep.subr.bf16.mxu0 0
      %1888 = vmatpush1.bf16.msra.mxu0 0
      %1889 = vmatprep.subr.bf16.mxu0 0
      %1890 = vmatpush1.bf16.msra.mxu0 %v1877
      %1891 = vmatprep.subr.bf16.mxu0 0
      %1892 = vmatpush1.bf16.msra.mxu0 %v1822
      %1893 = vmatprep.subr.bf16.mxu0 0
      %1894 = vmatpush1.bf16.msra.mxu0 %v1821
      %1895 = vmatprep.subr.bf16.mxu0 0
      %1896 = vmatpush2.bf16.msra.mxu0 0
      %1897 = vmatprep.subr.bf16.mxu0 0
      %1898 = vmatpush2.bf16.msra.mxu0 0
      %1899 = vmatprep.subr.bf16.mxu0 0
      %1900 = vmatpush2.bf16.msra.mxu0 0
      %1901 = vmatprep.subr.bf16.mxu0 0
      %1902 = vmatpush2.bf16.msra.mxu0 0
      %1903 = vmatprep.subr.bf16.mxu0 0
      %1904 = vmatpush2.bf16.msra.mxu0 0
      %1905 = vmatprep.subr.bf16.mxu0 0
      %1906 = vmatpush2.bf16.msra.mxu0 0
      %1907 = vmatprep.subr.bf16.mxu0 0
      %1908 = vmatpush2.bf16.msra.mxu0 0
      %1909 = vmatprep.subr.bf16.mxu0 0
      %1910 = vmatpush2.bf16.msra.mxu0 0
      %1911 = vmatprep.mubr.bf16.mxu0 0
      %1912 = vmatmul.mubr.bf16.gmra.mxu0 %v1827
      %v1913 = vpop.f32.mrf.mxu0
      %v1914 = vadd.f32 0.0, %v1913
      %v1915 = vpop.f32.mrf.mxu0
      %v1916 = vpop.f32.mrf.mxu0
      %v1917 = vadd.f32 0.0, %v1916
      %v1918 = vpop.f32.mrf.mxu0
      %1919 = vmatprep.mubr.bf16.mxu0 0
      %1920 = vmatmul.mubr.bf16.gmra.mxu0 %v1829
      %v1921 = vpop.f32.mrf.mxu0
      %v1922 = vadd.f32 0.0, %v1921
      %v1923 = vpop.f32.mrf.mxu0
      %v1924 = vpop.f32.mrf.mxu0
      %v1925 = vadd.f32 0.0, %v1924
      %v1926 = vpop.f32.mrf.mxu0
      %1927 = vmatprep.mubr.bf16.mxu0 0
      %1928 = vmatmul.mubr.bf16.gmra.mxu0 %v1831
      %v1929 = vpop.f32.mrf.mxu0
      %v1930 = vadd.f32 0.0, %v1929
      %v1931 = vpop.f32.mrf.mxu0
      %v1932 = vpop.f32.mrf.mxu0
      %v1933 = vadd.f32 0.0, %v1932
      %v1934 = vpop.f32.mrf.mxu0
      %1935 = vmatprep.mubr.bf16.mxu0 0
      %1936 = vmatmul.mubr.bf16.gmra.mxu0 %v1833
      %v1937 = vpop.f32.mrf.mxu0
      %v1938 = vadd.f32 0.0, %v1937
      %v1939 = vpop.f32.mrf.mxu0
      %v1940 = vpop.f32.mrf.mxu0
      %v1941 = vadd.f32 0.0, %v1940
      %v1942 = vpop.f32.mrf.mxu0
      %1943 = vmatprep.mubr.bf16.mxu0 0
      %1944 = vmatmul.mubr.bf16.gmra.mxu0 %v1835
      %v1945 = vpop.f32.mrf.mxu0
      %v1946 = vadd.f32 0.0, %v1945
      %v1947 = vpop.f32.mrf.mxu0
      %v1948 = vpop.f32.mrf.mxu0
      %v1949 = vadd.f32 0.0, %v1948
      %v1950 = vpop.f32.mrf.mxu0
      %1951 = vmatprep.mubr.bf16.mxu0 0
      %1952 = vmatmul.mubr.bf16.gmra.mxu0 %v1837
      %v1953 = vpop.f32.mrf.mxu0
      %v1954 = vadd.f32 0.0, %v1953
      %v1955 = vpop.f32.mrf.mxu0
      %v1956 = vpop.f32.mrf.mxu0
      %v1957 = vadd.f32 0.0, %v1956
      %v1958 = vpop.f32.mrf.mxu0
      %1959 = vmatprep.mubr.bf16.mxu0 0
      %1960 = vmatmul.mubr.bf16.gmra.mxu0 %v1839
      %v1961 = vpop.f32.mrf.mxu0
      %v1962 = vadd.f32 0.0, %v1961
      %v1963 = vpop.f32.mrf.mxu0
      %v1964 = vpop.f32.mrf.mxu0
      %v1965 = vadd.f32 0.0, %v1964
      %v1966 = vpop.f32.mrf.mxu0
      %1967 = vmatprep.mubr.bf16.mxu0 0
      %1968 = vmatmul.mubr.bf16.gmra.mxu0 %v1841
      %v1969 = vpop.f32.mrf.mxu0
      %v1970 = vadd.f32 0.0, %v1969
      %v1971 = vpop.f32.mrf.mxu0
      %v1972 = vpop.f32.mrf.mxu0
      %v1973 = vadd.f32 0.0, %v1972
      %v1974 = vpop.f32.mrf.mxu0
      %1975 = vmatprep.mubr.bf16.mxu0 0
      %1976 = vmatmul.mubr.bf16.gmra.mxu0 %v1843
      %v1977 = vpop.f32.mrf.mxu0
      %v1978 = vadd.f32 0.0, %v1977
      %v1979 = vpop.f32.mrf.mxu0
      %v1980 = vpop.f32.mrf.mxu0
      %v1981 = vadd.f32 0.0, %v1980
      %v1982 = vpop.f32.mrf.mxu0
      %1983 = vmatprep.mubr.bf16.mxu0 0
      %1984 = vmatmul.mubr.bf16.gmra.mxu0 %v1845
      %v1985 = vpop.f32.mrf.mxu0
      %v1986 = vadd.f32 0.0, %v1985
      %v1987 = vpop.f32.mrf.mxu0
      %v1988 = vpop.f32.mrf.mxu0
      %v1989 = vadd.f32 0.0, %v1988
      %v1990 = vpop.f32.mrf.mxu0
      %1991 = vmatprep.mubr.bf16.mxu0 0
      %1992 = vmatmul.mubr.bf16.gmra.mxu0 %v1847
      %v1993 = vpop.f32.mrf.mxu0
      %v1994 = vadd.f32 0.0, %v1993
      %v1995 = vpop.f32.mrf.mxu0
      %v1996 = vpop.f32.mrf.mxu0
      %v1997 = vadd.f32 0.0, %v1996
      %v1998 = vpop.f32.mrf.mxu0
      %1999 = vmatprep.mubr.bf16.mxu0 0
      %2000 = vmatmul.mubr.bf16.gmra.mxu0 %v1849
      %v2001 = vpop.f32.mrf.mxu0
      %v2002 = vadd.f32 0.0, %v2001
      %v2003 = vpop.f32.mrf.mxu0
      %v2004 = vpop.f32.mrf.mxu0
      %v2005 = vadd.f32 0.0, %v2004
      %v2006 = vpop.f32.mrf.mxu0
      %2007 = vmatprep.mubr.bf16.mxu0 0
      %2008 = vmatmul.mubr.bf16.gmra.mxu0 %v1851
      %v2009 = vpop.f32.mrf.mxu0
      %v2010 = vadd.f32 0.0, %v2009
      %v2011 = vpop.f32.mrf.mxu0
      %v2012 = vpop.f32.mrf.mxu0
      %v2013 = vadd.f32 0.0, %v2012
      %v2014 = vpop.f32.mrf.mxu0
      %2015 = vmatprep.mubr.bf16.mxu0 0
      %2016 = vmatmul.mubr.bf16.gmra.mxu0 %v1853
      %v2017 = vpop.f32.mrf.mxu0
      %v2018 = vadd.f32 0.0, %v2017
      %v2019 = vpop.f32.mrf.mxu0
      %v2020 = vpop.f32.mrf.mxu0
      %v2021 = vadd.f32 0.0, %v2020
      %v2022 = vpop.f32.mrf.mxu0
      %2023 = vmatprep.mubr.bf16.mxu0 0
      %2024 = vmatmul.mubr.bf16.gmra.mxu0 %v1855
      %v2025 = vpop.f32.mrf.mxu0
      %v2026 = vadd.f32 0.0, %v2025
      %v2027 = vpop.f32.mrf.mxu0
      %v2028 = vpop.f32.mrf.mxu0
      %v2029 = vadd.f32 0.0, %v2028
      %v2030 = vpop.f32.mrf.mxu0
      %2031 = vmatprep.mubr.bf16.mxu0 0
      %2032 = vmatmul.mubr.bf16.gmra.mxu0 %v1857
      %v2033 = vpop.f32.mrf.mxu0
      %v2034 = vadd.f32 0.0, %v2033
      %v2035 = vpop.f32.mrf.mxu0
      %v2036 = vpop.f32.mrf.mxu0
      %v2037 = vadd.f32 0.0, %v2036
      %v2038 = vpop.f32.mrf.mxu0
      %2039 = vmatprep.mubr.bf16.mxu0 0
      %2040 = vmatmul.mubr.bf16.gmra.mxu0 %v1859
      %v2041 = vpop.f32.mrf.mxu0
      %v2042 = vadd.f32 0.0, %v2041
      %v2043 = vpop.f32.mrf.mxu0
      %v2044 = vpop.f32.mrf.mxu0
      %v2045 = vadd.f32 0.0, %v2044
      %v2046 = vpop.f32.mrf.mxu0
      %2047 = vmatprep.mubr.bf16.mxu0 0
      %2048 = vmatmul.mubr.bf16.gmra.mxu0 %v1861
      %v2049 = vpop.f32.mrf.mxu0
      %v2050 = vadd.f32 0.0, %v2049
      %v2051 = vpop.f32.mrf.mxu0
      %v2052 = vpop.f32.mrf.mxu0
      %v2053 = vadd.f32 0.0, %v2052
      %v2054 = vpop.f32.mrf.mxu0
      %2055 = vmatprep.mubr.bf16.mxu0 0
      %2056 = vmatmul.mubr.bf16.gmra.mxu0 %v1863
      %v2057 = vpop.f32.mrf.mxu0
      %v2058 = vadd.f32 0.0, %v2057
      %v2059 = vpop.f32.mrf.mxu0
      %v2060 = vpop.f32.mrf.mxu0
      %v2061 = vadd.f32 0.0, %v2060
      %v2062 = vpop.f32.mrf.mxu0
      %2063 = vmatprep.mubr.bf16.mxu0 0
      %2064 = vmatmul.mubr.bf16.gmra.mxu0 %v1865
      %v2065 = vpop.f32.mrf.mxu0
      %v2066 = vadd.f32 0.0, %v2065
      %v2067 = vpop.f32.mrf.mxu0
      %v2068 = vpop.f32.mrf.mxu0
      %v2069 = vadd.f32 0.0, %v2068
      %v2070 = vpop.f32.mrf.mxu0
      %2071 = vmatprep.mubr.bf16.mxu0 0
      %2072 = vmatmul.mubr.bf16.gmra.mxu0 %v1867
      %v2073 = vpop.f32.mrf.mxu0
      %v2074 = vadd.f32 0.0, %v2073
      %v2075 = vpop.f32.mrf.mxu0
      %v2076 = vpop.f32.mrf.mxu0
      %v2077 = vadd.f32 0.0, %v2076
      %v2078 = vpop.f32.mrf.mxu0
      %2079 = vmatprep.mubr.bf16.mxu0 0
      %2080 = vmatmul.mubr.bf16.gmra.mxu0 %v1869
      %v2081 = vpop.f32.mrf.mxu0
      %v2082 = vadd.f32 0.0, %v2081
      %v2083 = vpop.f32.mrf.mxu0
      %v2084 = vpop.f32.mrf.mxu0
      %v2085 = vadd.f32 0.0, %v2084
      %v2086 = vpop.f32.mrf.mxu0
      %2087 = vmatprep.mubr.bf16.mxu0 0
      %2088 = vmatmul.mubr.bf16.gmra.mxu0 %v1871
      %v2089 = vpop.f32.mrf.mxu0
      %v2090 = vadd.f32 0.0, %v2089
      %v2091 = vpop.f32.mrf.mxu0
      %v2092 = vpop.f32.mrf.mxu0
      %v2093 = vadd.f32 0.0, %v2092
      %v2094 = vpop.f32.mrf.mxu0
      %2095 = vmatprep.mubr.bf16.mxu0 0
      %2096 = vmatmul.mubr.bf16.gmra.mxu0 %v1873
      %v2097 = vpop.f32.mrf.mxu0
      %v2098 = vadd.f32 0.0, %v2097
      %v2099 = vpop.f32.mrf.mxu0
      %v2100 = vpop.f32.mrf.mxu0
      %v2101 = vadd.f32 0.0, %v2100
      %v2102 = vpop.f32.mrf.mxu0
      %2103 = vdwg.mxu0
      %v2104 = vld [vmem:[%s264] sm:$0x1]
      %v2106 = vlaneseq
      %v2107 = vshrl.u32 %v2106, 7
      %v2108 = vsub.s32 0, %v2107
      %v2109 = vrot.slane %v2104, %v2108
      %v2111 = vmul.f32 %v1914, %v2109
      %v2112 = vmul.f32 %v1917, %v2109
      %v2113 = vmul.f32 %v1922, %v2109
      %v2114 = vmul.f32 %v1925, %v2109
      %v2115 = vmul.f32 %v1930, %v2109
      %v2116 = vmul.f32 %v1933, %v2109
      %v2117 = vmul.f32 %v1938, %v2109
      %v2118 = vmul.f32 %v1941, %v2109
      %v2119 = vmul.f32 %v1946, %v2109
      %v2120 = vmul.f32 %v1949, %v2109
      %v2121 = vmul.f32 %v1954, %v2109
      %v2122 = vmul.f32 %v1957, %v2109
      %v2123 = vmul.f32 %v1962, %v2109
      %v2124 = vmul.f32 %v1965, %v2109
      %v2125 = vmul.f32 %v1970, %v2109
      %v2126 = vmul.f32 %v1973, %v2109
      %v2127 = vmul.f32 %v1978, %v2109
      %v2128 = vmul.f32 %v1981, %v2109
      %v2129 = vmul.f32 %v1986, %v2109
      %v2130 = vmul.f32 %v1989, %v2109
      %v2131 = vmul.f32 %v1994, %v2109
      %v2132 = vmul.f32 %v1997, %v2109
      %v2133 = vmul.f32 %v2002, %v2109
      %v2134 = vmul.f32 %v2005, %v2109
      %v2135 = vmul.f32 %v2010, %v2109
      %v2136 = vmul.f32 %v2013, %v2109
      %v2137 = vmul.f32 %v2018, %v2109
      %v2138 = vmul.f32 %v2021, %v2109
      %v2139 = vmul.f32 %v2026, %v2109
      %v2140 = vmul.f32 %v2029, %v2109
      %v2141 = vmul.f32 %v2034, %v2109
      %v2142 = vmul.f32 %v2037, %v2109
      %v2143 = vmul.f32 %v2042, %v2109
      %v2144 = vmul.f32 %v2045, %v2109
      %v2145 = vmul.f32 %v2050, %v2109
      %v2146 = vmul.f32 %v2053, %v2109
      %v2147 = vmul.f32 %v2058, %v2109
      %v2148 = vmul.f32 %v2061, %v2109
      %v2149 = vmul.f32 %v2066, %v2109
      %v2150 = vmul.f32 %v2069, %v2109
      %v2151 = vmul.f32 %v2074, %v2109
      %v2152 = vmul.f32 %v2077, %v2109
      %v2153 = vmul.f32 %v2082, %v2109
      %v2154 = vmul.f32 %v2085, %v2109
      %v2155 = vmul.f32 %v2090, %v2109
      %v2156 = vmul.f32 %v2093, %v2109
      %v2157 = vmul.f32 %v2098, %v2109
      %v2158 = vmul.f32 %v2101, %v2109
      %v2159 = vld [vmem:[%s267] sm:$0x1]
      %v2161 = vlaneseq
      %v2162 = vshrl.u32 %v2161, 7
      %v2163 = vsub.s32 0, %v2162
      %v2164 = vrot.slane %v2159, %v2163
      %v2166 = vadd.f32 %v2111, %v2164
      %v2167 = vadd.f32 %v2112, %v2164
      %v2168 = vadd.f32 %v2113, %v2164
      %v2169 = vadd.f32 %v2114, %v2164
      %v2170 = vadd.f32 %v2115, %v2164
      %v2171 = vadd.f32 %v2116, %v2164
      %v2172 = vadd.f32 %v2117, %v2164
      %v2173 = vadd.f32 %v2118, %v2164
      %v2174 = vadd.f32 %v2119, %v2164
      %v2175 = vadd.f32 %v2120, %v2164
      %v2176 = vadd.f32 %v2121, %v2164
      %v2177 = vadd.f32 %v2122, %v2164
      %v2178 = vadd.f32 %v2123, %v2164
      %v2179 = vadd.f32 %v2124, %v2164
      %v2180 = vadd.f32 %v2125, %v2164
      %v2181 = vadd.f32 %v2126, %v2164
      %v2182 = vadd.f32 %v2127, %v2164
      %v2183 = vadd.f32 %v2128, %v2164
      %v2184 = vadd.f32 %v2129, %v2164
      %v2185 = vadd.f32 %v2130, %v2164
      %v2186 = vadd.f32 %v2131, %v2164
      %v2187 = vadd.f32 %v2132, %v2164
      %v2188 = vadd.f32 %v2133, %v2164
      %v2189 = vadd.f32 %v2134, %v2164
      %v2190 = vadd.f32 %v2135, %v2164
      %v2191 = vadd.f32 %v2136, %v2164
      %v2192 = vadd.f32 %v2137, %v2164
      %v2193 = vadd.f32 %v2138, %v2164
      %v2194 = vadd.f32 %v2139, %v2164
      %v2195 = vadd.f32 %v2140, %v2164
      %v2196 = vadd.f32 %v2141, %v2164
      %v2197 = vadd.f32 %v2142, %v2164
      %v2198 = vadd.f32 %v2143, %v2164
      %v2199 = vadd.f32 %v2144, %v2164
      %v2200 = vadd.f32 %v2145, %v2164
      %v2201 = vadd.f32 %v2146, %v2164
      %v2202 = vadd.f32 %v2147, %v2164
      %v2203 = vadd.f32 %v2148, %v2164
      %v2204 = vadd.f32 %v2149, %v2164
      %v2205 = vadd.f32 %v2150, %v2164
      %v2206 = vadd.f32 %v2151, %v2164
      %v2207 = vadd.f32 %v2152, %v2164
      %v2208 = vadd.f32 %v2153, %v2164
      %v2209 = vadd.f32 %v2154, %v2164
      %v2210 = vadd.f32 %v2155, %v2164
      %v2211 = vadd.f32 %v2156, %v2164
      %v2212 = vadd.f32 %v2157, %v2164
      %v2213 = vadd.f32 %v2158, %v2164
      %v2214 = vmax.f32 %v2166, 0.0
      %v2215 = vmax.f32 %v2167, 0.0
      %v2216 = vmax.f32 %v2168, 0.0
      %v2217 = vmax.f32 %v2169, 0.0
      %v2218 = vmax.f32 %v2170, 0.0
      %v2219 = vmax.f32 %v2171, 0.0
      %v2220 = vmax.f32 %v2172, 0.0
      %v2221 = vmax.f32 %v2173, 0.0
      %v2222 = vmax.f32 %v2174, 0.0
      %v2223 = vmax.f32 %v2175, 0.0
      %v2224 = vmax.f32 %v2176, 0.0
      %v2225 = vmax.f32 %v2177, 0.0
      %v2226 = vmax.f32 %v2178, 0.0
      %v2227 = vmax.f32 %v2179, 0.0
      %v2228 = vmax.f32 %v2180, 0.0
      %v2229 = vmax.f32 %v2181, 0.0
      %v2230 = vmax.f32 %v2182, 0.0
      %v2231 = vmax.f32 %v2183, 0.0
      %v2232 = vmax.f32 %v2184, 0.0
      %v2233 = vmax.f32 %v2185, 0.0
      %v2234 = vmax.f32 %v2186, 0.0
      %v2235 = vmax.f32 %v2187, 0.0
      %v2236 = vmax.f32 %v2188, 0.0
      %v2237 = vmax.f32 %v2189, 0.0
      %v2238 = vmax.f32 %v2190, 0.0
      %v2239 = vmax.f32 %v2191, 0.0
      %v2240 = vmax.f32 %v2192, 0.0
      %v2241 = vmax.f32 %v2193, 0.0
      %v2242 = vmax.f32 %v2194, 0.0
      %v2243 = vmax.f32 %v2195, 0.0
      %v2244 = vmax.f32 %v2196, 0.0
      %v2245 = vmax.f32 %v2197, 0.0
      %v2246 = vmax.f32 %v2198, 0.0
      %v2247 = vmax.f32 %v2199, 0.0
      %v2248 = vmax.f32 %v2200, 0.0
      %v2249 = vmax.f32 %v2201, 0.0
      %v2250 = vmax.f32 %v2202, 0.0
      %v2251 = vmax.f32 %v2203, 0.0
      %v2252 = vmax.f32 %v2204, 0.0
      %v2253 = vmax.f32 %v2205, 0.0
      %v2254 = vmax.f32 %v2206, 0.0
      %v2255 = vmax.f32 %v2207, 0.0
      %v2256 = vmax.f32 %v2208, 0.0
      %v2257 = vmax.f32 %v2209, 0.0
      %v2258 = vmax.f32 %v2210, 0.0
      %v2259 = vmax.f32 %v2211, 0.0
      %v2260 = vmax.f32 %v2212, 0.0
      %v2261 = vmax.f32 %v2213, 0.0
      %2262 = vst [vmem:[%s279] sm:$0xff] %v2214
      %2263 = vst [vmem:[%s279 + $0x8] sm:$0xff] %v2215
      %2264 = vst [vmem:[%s279 + $0x10] sm:$0xff] %v2216
      %2265 = vst [vmem:[%s279 + $0x18] sm:$0xff] %v2217
      %2266 = vst [vmem:[%s279 + $0x20] sm:$0xff] %v2218
      %2267 = vst [vmem:[%s279 + $0x28] sm:$0xff] %v2219
      %2268 = vst [vmem:[%s279 + $0x30] sm:$0xff] %v2220
      %2269 = vst [vmem:[%s279 + $0x38] sm:$0xff] %v2221
      %2270 = vst [vmem:[%s279 + $0x40] sm:$0xff] %v2222
      %2271 = vst [vmem:[%s279 + $0x48] sm:$0xff] %v2223
      %2272 = vst [vmem:[%s279 + $0x50] sm:$0xff] %v2224
      %2273 = vst [vmem:[%s279 + $0x58] sm:$0xff] %v2225
      %2274 = vst [vmem:[%s279 + $0x60] sm:$0xff] %v2226
      %2275 = vst [vmem:[%s279 + $0x68] sm:$0xff] %v2227
      %2276 = vst [vmem:[%s279 + $0x70] sm:$0xff] %v2228
      %2277 = vst [vmem:[%s279 + $0x78] sm:$0xff] %v2229
      %2278 = vst [vmem:[%s279 + $0x80] sm:$0xff] %v2230
      %2279 = vst [vmem:[%s279 + $0x88] sm:$0xff] %v2231
      %2280 = vst [vmem:[%s279 + $0x90] sm:$0xff] %v2232
      %2281 = vst [vmem:[%s279 + $0x98] sm:$0xff] %v2233
      %2282 = vst [vmem:[%s279 + $0xa0] sm:$0xff] %v2234
      %2283 = vst [vmem:[%s279 + $0xa8] sm:$0xff] %v2235
      %2284 = vst [vmem:[%s279 + $0xb0] sm:$0xff] %v2236
      %2285 = vst [vmem:[%s279 + $0xb8] sm:$0xff] %v2237
      %2286 = vst [vmem:[%s279 + $0xc0] sm:$0xff] %v2238
      %2287 = vst [vmem:[%s279 + $0xc8] sm:$0xff] %v2239
      %2288 = vst [vmem:[%s279 + $0xd0] sm:$0xff] %v2240
      %2289 = vst [vmem:[%s279 + $0xd8] sm:$0xff] %v2241
      %2290 = vst [vmem:[%s279 + $0xe0] sm:$0xff] %v2242
      %2291 = vst [vmem:[%s279 + $0xe8] sm:$0xff] %v2243
      %2292 = vst [vmem:[%s279 + $0xf0] sm:$0xff] %v2244
      %2293 = vst [vmem:[%s279 + $0xf8] sm:$0xff] %v2245
      %2294 = vst [vmem:[%s279 + $0x100] sm:$0xff] %v2246
      %2295 = vst [vmem:[%s279 + $0x108] sm:$0xff] %v2247
      %2296 = vst [vmem:[%s279 + $0x110] sm:$0xff] %v2248
      %2297 = vst [vmem:[%s279 + $0x118] sm:$0xff] %v2249
      %2298 = vst [vmem:[%s279 + $0x120] sm:$0xff] %v2250
      %2299 = vst [vmem:[%s279 + $0x128] sm:$0xff] %v2251
      %2300 = vst [vmem:[%s279 + $0x130] sm:$0xff] %v2252
      %2301 = vst [vmem:[%s279 + $0x138] sm:$0xff] %v2253
      %2302 = vst [vmem:[%s279 + $0x140] sm:$0xff] %v2254
      %2303 = vst [vmem:[%s279 + $0x148] sm:$0xff] %v2255
      %2304 = vst [vmem:[%s279 + $0x150] sm:$0xff] %v2256
      %2305 = vst [vmem:[%s279 + $0x158] sm:$0xff] %v2257
      %2306 = vst [vmem:[%s279 + $0x160] sm:$0xff] %v2258
      %2307 = vst [vmem:[%s279 + $0x168] sm:$0xff] %v2259
      %2308 = vst [vmem:[%s279 + $0x170] sm:$0xff] %v2260
      %2309 = vst [vmem:[%s279 + $0x178] sm:$0xff] %v2261
      %s2310 = smul.u32 48, %s21
      %p2311 = scmp.lt.s32.totalorder %s20, 1
      %s2312 = scalar_select %p2311, %s20, 1
      %p2313 = scmp.lt.s32.totalorder %s2310, 47
      %s2314 = scalar_select %p2313, %s2310, 47
      %p2315 = scmp.lt.s32.totalorder %s22, 0
      %s2316 = scalar_select %p2315, %s22, 0
      %s2317 = sadd.s32 %s2316, %s2314
      %s2318 = smul.addr %s2312, 48
      %s2319 = sadd.s32 %s2317, %s2318
      %s2320 = smul.addr %s2319, 8
      %s2321 = scalar_lea.vmem %s4, %s2320
      // Predicated region
      $region37: #{basic_conv_forward.1} parent=35 // pred_check
        %p2322 = pneg %p160
      $region38: #{basic_conv_forward.1} parent=35 // pred_check_branch
        %2324 = sbr.rel (%p2322) target = $region40
      $region39: #{basic_conv_forward.1} parent=35 // pred_region
        %s2325 = smul.u32 48, %s21
      $region40: #{basic_conv_forward.1} parent=35 // pred_fallthru
        _
    $region36: #{basic_conv_forward.1} parent=5 // pred_fallthru
      _
    %p2326 = scmp.le.s32.totalorder 2, %s10
    // Predicated region
    $region41: #{basic_conv_forward.1} parent=5 // pred_check
      %p2327 = pneg %p2326
    $region42: #{basic_conv_forward.1} parent=5 // pred_check_branch
      %2329 = sbr.rel (%p2327) target = $region44
    $region43: #{basic_conv_forward.1} parent=5 // pred_region
      %s2330 = ssub.s32 %s10, 2
      // Predicated region
      $region45: #{basic_conv_forward.1} parent=43 // pred_check
        %p2331 = pneg %p166
      $region46: #{basic_conv_forward.1} parent=43 // pred_check_branch
        %2333 = sbr.rel (%p2331) target = $region48
      $region47: #{basic_conv_forward.1} parent=43 // pred_region
        %s2334 = smul.u32 48, %s24
        %p2335 = scmp.lt.s32.totalorder %s23, 1
        %s2336 = scalar_select %p2335, %s23, 1
        %p2337 = scmp.lt.s32.totalorder %s2334, 47
        %s2338 = scalar_select %p2337, %s2334, 47
        %p2339 = scmp.lt.s32.totalorder %s25, 0
        %s2340 = scalar_select %p2339, %s25, 0
        %s2341 = sadd.s32 %s2340, %s2338
        %s2342 = smul.addr %s2336, 48
        %s2343 = sadd.s32 %s2341, %s2342
        %s2344 = smul.addr %s2343, 8
        %s2345 = scalar_lea.vmem %s4, %s2344
      $region48: #{basic_conv_forward.1} parent=43 // pred_fallthru
        _
    $region44: #{basic_conv_forward.1} parent=5 // pred_fallthru
      _
  $region6: #{basic_conv_forward.1} parent=0 // loop_footer
    %s14 = sadd.s32 1, %s10
  $region7: #{basic_conv_forward.1} parent=0 // loop_footer_branch
    %9 = sbr.rel target = $region3
  $region8: #{basic_conv_forward.1} parent=0 // loop_exit
    _

</llo_original>
